<compile_context>
chip_gen: v5e
topology: v5e:2x2
jax: 0.10.0
libtpu: 0.0.40
codegen_flags: <defaults>
</compile_context>

<pallas_src>
import functools

import jax
import jax.numpy as jnp
from jax.experimental import pallas as pl
from jax.experimental.pallas import tpu as pltpu


# ---------------------------------------------------------------------------
# Pallas kernels
# ---------------------------------------------------------------------------
def _encoder_kernel(tok_ref, ew, eb, w1, b1, w2, b2, pw, pb, out_ref):
    """Fused: gelu(tok@We+be) -> MLP(gelu, linear) -> +residual -> proj."""
    tok = tok_ref[...]                                            # bf16 [TM, 9*C]
    h = jnp.dot(tok, ew[...], preferred_element_type=jnp.float32) + eb[...]
    h = jax.nn.gelu(h)                                            # [TM, hidden] f32
    h2 = jnp.dot(h.astype(jnp.bfloat16), w1[...],
                 preferred_element_type=jnp.float32) + b1[...]
    h2 = jax.nn.gelu(h2)                                          # [TM, 2*hidden]
    h2 = jnp.dot(h2.astype(jnp.bfloat16), w2[...],
                 preferred_element_type=jnp.float32) + b2[...]
    h = h + h2                                                    # residual (VPU, free)
    lat = jnp.dot(h.astype(jnp.bfloat16), pw[...],
                  preferred_element_type=jnp.float32) + pb[...]
    out_ref[...] = lat.astype(out_ref.dtype)


def _diffusion_kernel(temb_ref, latp_ref, tw1, tb1, tw2, tb2,
                      t1_ref, b1t, t2_ref, b2t, out_ref, *, H, W, hidden):
    """Per-batch fused diffusion step:
       t-MLP -> FiLM params; conv1 (3 Toeplitz matmuls) + FiLM + GELU;
       conv2 (3 Toeplitz matmuls) -> noise in lane-dense [H, W*latent] layout."""
    # --- timestep embedding MLP -> FiLM scale / shift (tiny matmuls) ---------
    te = temb_ref[0]                                              # bf16 [1, hidden]
    ht = jnp.dot(te, tw1[...], preferred_element_type=jnp.float32) + tb1[...]
    ht = ht * jax.nn.sigmoid(ht)                                  # SiLU
    film = jnp.dot(ht.astype(jnp.bfloat16), tw2[...],
                   preferred_element_type=jnp.float32) + tb2[...]  # [1, 2*hidden]
    scale = jnp.concatenate([film[:, :hidden]] * W, axis=1)        # [1, W*hidden]
    shift = jnp.concatenate([film[:, hidden:]] * W, axis=1)        # [1, W*hidden]

    # --- conv1: 3x3 pad=1 as 3 row-shifted block-Toeplitz matmuls ------------
    latp = latp_ref[0]                                            # bf16 [H+2, W*Clat]
    acc = (jnp.dot(latp[0:H, :],     t1_ref[0], preferred_element_type=jnp.float32)
           + jnp.dot(latp[1:H + 1, :], t1_ref[1], preferred_element_type=jnp.float32)
           + jnp.dot(latp[2:H + 2, :], t1_ref[2], preferred_element_type=jnp.float32)
           + b1t[...])                                            # [H, W*hidden]

    # --- FiLM + GELU epilogue (rides in VPU/EUP slots under the MXU) ---------
    h = jax.nn.gelu(acc * (1.0 + scale) + shift)                  # [H, W*hidden]

    # --- conv2: zero-pad rows as a value, 3 more Toeplitz matmuls ------------
    zrow = jnp.zeros((1, W * hidden), jnp.float32)
    hp = jnp.concatenate([zrow, h, zrow], axis=0).astype(jnp.bfloat16)  # [H+2, W*hidden]
    out = (jnp.dot(hp[0:H, :],     t2_ref[0], preferred_element_type=jnp.float32)
           + jnp.dot(hp[1:H + 1, :], t2_ref[1], preferred_element_type=jnp.float32)
           + jnp.dot(hp[2:H + 2, :], t2_ref[2], preferred_element_type=jnp.float32)
           + b2t[...])                                            # [H, W*latent]
    out_ref[0] = out.astype(out_ref.dtype)


# ---------------------------------------------------------------------------
# JAX glue: im2col (encoder stride-2 conv), timestep embedding, param prep
# ---------------------------------------------------------------------------
def im2col(x_nhwc, k, stride, pad):
    """x: [B,H,W,C] -> [B,Ho,Wo,k*k*C] (patch order: (di, dj, c))."""
    B, H, W, C = x_nhwc.shape
    xp = jnp.pad(x_nhwc, ((0, 0), (pad, pad), (pad, pad), (0, 0)))
    Ho = (H + 2 * pad - k) // stride + 1
    Wo = (W + 2 * pad - k) // stride + 1
    patches = []
    for di in range(k):
        for dj in range(k):
            patches.append(
                xp[:, di:di + stride * Ho:stride, dj:dj + stride * Wo:stride, :])
    return jnp.concatenate(patches, axis=-1)


def timestep_embedding(t, dim):
    half = dim // 2
    freqs = jnp.exp(-jnp.log(10000.0) * jnp.arange(half, dtype=jnp.float32) / half)
    args = t.astype(jnp.float32)[:, None] * freqs[None, :]
    return jnp.concatenate([jnp.sin(args), jnp.cos(args)], axis=-1)


def conv_row_toeplitz(wk, Wout, Win, stride=1, pad=1):
    """wk: [kh,kw,Cin,Cout] -> T: [kh, Win*Cin, Wout*Cout] block-banded weight.

    T[di] maps one channels-fastest input row (width Win*Cin) to one output row
    (width Wout*Cout), encoding the kw taps + W zero-padding; the kh row taps
    are handled in-kernel by summing kh row-shifted matmuls."""
    kh, kw, Cin, Cout = wk.shape
    T = jnp.zeros((kh, Win * Cin, Wout * Cout), jnp.float32)
    for di in range(kh):
        for dj in range(kw):
            for w in range(Wout):
                j = w * stride + dj - pad
                if 0 <= j < Win:
                    T = T.at[di, j * Cin:(j + 1) * Cin,
                             w * Cout:(w + 1) * Cout].set(wk[di, dj])
    return T


def init_params(key, in_ch=4, hidden=32, latent_ch=4, k=3):
    def nxt():
        nonlocal key
        key, sub = jax.random.split(key)
        return sub

    def dense(kk, shape):
        return 0.02 * jax.random.normal(kk, shape, jnp.float32)

    p = {}
    # hybrid encoder
    p["enc_conv_w"] = dense(nxt(), (k * k * in_ch, hidden))
    p["enc_conv_b"] = jnp.zeros((hidden,), jnp.float32)
    p["mlp_w1"] = dense(nxt(), (hidden, 2 * hidden))
    p["mlp_b1"] = jnp.zeros((2 * hidden,), jnp.float32)
    p["mlp_w2"] = dense(nxt(), (2 * hidden, hidden))
    p["mlp_b2"] = jnp.zeros((hidden,), jnp.float32)
    p["proj_w"] = dense(nxt(), (hidden, latent_ch))
    p["proj_b"] = jnp.zeros((latent_ch,), jnp.float32)
    # diffusion model
    p["t_w1"] = dense(nxt(), (hidden, hidden))
    p["t_b1"] = jnp.zeros((hidden,), jnp.float32)
    p["t_w2"] = dense(nxt(), (hidden, 2 * hidden))
    p["t_b2"] = jnp.zeros((2 * hidden,), jnp.float32)
    p["d_conv1_w"] = dense(nxt(), (k, k, latent_ch, hidden))
    p["d_conv1_b"] = jnp.zeros((hidden,), jnp.float32)
    p["d_conv2_w"] = dense(nxt(), (k, k, hidden, latent_ch))
    p["d_conv2_b"] = jnp.zeros((latent_ch,), jnp.float32)
    return p


def prepare_params(p, lat_w):
    """One-time weight preprocessing: bf16 casts + block-Toeplitz conv weights."""
    bf = jnp.bfloat16
    q = {
        "enc_w": p["enc_conv_w"].astype(bf),
        "enc_b": p["enc_conv_b"].reshape(1, -1),
        "mlp_w1": p["mlp_w1"].astype(bf), "mlp_b1": p["mlp_b1"].reshape(1, -1),
        "mlp_w2": p["mlp_w2"].astype(bf), "mlp_b2": p["mlp_b2"].reshape(1, -1),
        "proj_w": p["proj_w"].astype(bf), "proj_b": p["proj_b"].reshape(1, -1),
        "t_w1": p["t_w1"].astype(bf), "t_b1": p["t_b1"].reshape(1, -1),
        "t_w2": p["t_w2"].astype(bf), "t_b2": p["t_b2"].reshape(1, -1),
        # conv weights as block-Toeplitz slabs; biases pre-tiled over W (lane-dense)
        "T1": conv_row_toeplitz(p["d_conv1_w"], Wout=lat_w, Win=lat_w).astype(bf),
        "b1t": jnp.tile(p["d_conv1_b"], lat_w).reshape(1, -1),
        "T2": conv_row_toeplitz(p["d_conv2_w"], Wout=lat_w, Win=lat_w).astype(bf),
        "b2t": jnp.tile(p["d_conv2_b"], lat_w).reshape(1, -1),
    }
    return q


# ---------------------------------------------------------------------------
# Forward passes (each side = ONE pallas_call)
# ---------------------------------------------------------------------------
def fused_encoder(x_nchw, q, tm=128):
    x = jnp.transpose(x_nchw, (0, 2, 3, 1))                   # NCHW -> NHWC
    # TODO(synk): at real SD resolutions move this stride-2 im2col in-kernel too
    # (here the 4-channel input makes the expansion negligible).
    patches = im2col(x, k=3, stride=2, pad=1)                 # [B, Ho, Wo, 9*C]
    B, Ho, Wo, KC = patches.shape
    M = B * Ho * Wo
    tok = patches.reshape(M, KC).astype(jnp.bfloat16)
    tm = min(tm, M)
    Mp = pl.cdiv(M, tm) * tm
    if Mp != M:
        tok = jnp.pad(tok, ((0, Mp - M), (0, 0)))

    hidden = q["enc_w"].shape[1]
    hidden2 = q["mlp_w1"].shape[1]
    latent = q["proj_w"].shape[1]
    flops = 2 * Mp * (KC * hidden + hidden * hidden2 + hidden2 * hidden
                      + hidden * latent)
    wbytes = 2 * (KC * hidden + 2 * hidden * hidden2 + hidden * latent)
    cost = pl.CostEstimate(flops=flops, transcendentals=Mp * (hidden + hidden2),
                           bytes_accessed=Mp * KC * 2 + Mp * latent * 4 + wbytes)

    lat = pl.pallas_call(
        _encoder_kernel,
        out_shape=jax.ShapeDtypeStruct((Mp, latent), jnp.float32),
        grid=(Mp // tm,),
        in_specs=[
            pl.BlockSpec((tm, KC), lambda i: (i, 0)),
            pl.BlockSpec(q["enc_w"].shape, lambda i: (0, 0)),   # resident weights
            pl.BlockSpec(q["enc_b"].shape, lambda i: (0, 0)),
            pl.BlockSpec(q["mlp_w1"].shape, lambda i: (0, 0)),
            pl.BlockSpec(q["mlp_b1"].shape, lambda i: (0, 0)),
            pl.BlockSpec(q["mlp_w2"].shape, lambda i: (0, 0)),
            pl.BlockSpec(q["mlp_b2"].shape, lambda i: (0, 0)),
            pl.BlockSpec(q["proj_w"].shape, lambda i: (0, 0)),
            pl.BlockSpec(q["proj_b"].shape, lambda i: (0, 0)),
        ],
        out_specs=pl.BlockSpec((tm, latent), lambda i: (i, 0)),
        compiler_params=pltpu.CompilerParams(dimension_semantics=("parallel",)),
        cost_estimate=cost,
    )(tok, q["enc_w"], q["enc_b"], q["mlp_w1"], q["mlp_b1"],
      q["mlp_w2"], q["mlp_b2"], q["proj_w"], q["proj_b"])

    return lat[:M].reshape(B, Ho, Wo, latent)                 # NHWC latent


def fused_diffusion(latent_nhwc, t, q):
    B, H, W, C = latent_nhwc.shape
    hidden = q["t_w1"].shape[0]
    latc = C

    # Tiny per-batch prep in XLA: sinusoidal embedding + row-padded latent slab.
    temb = timestep_embedding(t, hidden).reshape(B, 1, hidden).astype(jnp.bfloat16)
    lat_rows = latent_nhwc.reshape(B, H, W * C)               # lanes = (w, c)
    latp = jnp.pad(lat_rows, ((0, 0), (1, 1), (0, 0))).astype(jnp.bfloat16)

    flops = 2 * B * (hidden * hidden + hidden * 2 * hidden
                     + 3 * H * (W * C) * (W * hidden)
                     + 3 * H * (W * hidden) * (W * latc))
    cost = pl.CostEstimate(
        flops=flops, transcendentals=B * (H * W * hidden + 2 * hidden),
        bytes_accessed=(B * (H + 2) * W * C * 2 + B * H * W * latc * 4
                        + 2 * (q["T1"].size + q["T2"].size)))

    out = pl.pallas_call(
        functools.partial(_diffusion_kernel, H=H, W=W, hidden=hidden),
        out_shape=jax.ShapeDtypeStruct((B, H, W * latc), jnp.float32),
        grid=(B,),
        in_specs=[
            pl.BlockSpec((1, 1, hidden), lambda b: (b, 0, 0)),
            pl.BlockSpec((1, H + 2, W * C), lambda b: (b, 0, 0)),
            pl.BlockSpec(q["t_w1"].shape, lambda b: (0, 0)),
            pl.BlockSpec(q["t_b1"].shape, lambda b: (0, 0)),
            pl.BlockSpec(q["t_w2"].shape, lambda b: (0, 0)),
            pl.BlockSpec(q["t_b2"].shape, lambda b: (0, 0)),
            pl.BlockSpec(q["T1"].shape, lambda b: (0, 0, 0)),
            pl.BlockSpec(q["b1t"].shape, lambda b: (0, 0)),
            pl.BlockSpec(q["T2"].shape, lambda b: (0, 0, 0)),
            pl.BlockSpec(q["b2t"].shape, lambda b: (0, 0)),
        ],
        out_specs=pl.BlockSpec((1, H, W * latc), lambda b: (b, 0, 0)),
        compiler_params=pltpu.CompilerParams(dimension_semantics=("parallel",)),
        cost_estimate=cost,
    )(temb, latp, q["t_w1"], q["t_b1"], q["t_w2"], q["t_b2"],
      q["T1"], q["b1t"], q["T2"], q["b2t"])

    noise = out.reshape(B, H, W, latc)
    return jnp.transpose(noise, (0, 3, 1, 2))                 # NHWC -> NCHW


@jax.jit
def stable_diffusion_with_hybrid_encoder(x, t, prepared):
    latent = fused_encoder(x, prepared)
    return fused_diffusion(latent, t, prepared)


# ---------------------------------------------------------------------------
if __name__ == "__main__":
    key = jax.random.PRNGKey(0)
    k_x, k_p = jax.random.split(key)

    B, C, H, W = 2, 4, 16, 16
    x = jax.random.normal(k_x, (B, C, H, W), jnp.float32)     # NCHW, as in PyTorch
    t = jnp.array([3, 7], dtype=jnp.int32)                    # one timestep per batch

    params = init_params(k_p, in_ch=C, hidden=32, latent_ch=4)
    prepared = prepare_params(params, lat_w=W // 2)           # one-time weight prep

    noise_pred = stable_diffusion_with_hybrid_encoder(x, t, prepared)
    jax.block_until_ready(noise_pred)

    assert noise_pred.shape == (B, 4, H // 2, W // 2), noise_pred.shape
    assert noise_pred.dtype == jnp.float32
    assert bool(jnp.all(jnp.isfinite(noise_pred)))
    print("KERNEL_OK")
</pallas_src>

<mosaic_0001>
module attributes {stable_mosaic.version = 11 : i64} {
  func.func @_encoder_kernel(%arg0: i32, %arg1: memref<128x36xbf16, #tpu.memory_space<vmem>>, %arg2: memref<36x32xbf16, #tpu.memory_space<vmem>>, %arg3: memref<1x32xf32, #tpu.memory_space<vmem>>, %arg4: memref<32x64xbf16, #tpu.memory_space<vmem>>, %arg5: memref<1x64xf32, #tpu.memory_space<vmem>>, %arg6: memref<64x32xbf16, #tpu.memory_space<vmem>>, %arg7: memref<1x32xf32, #tpu.memory_space<vmem>>, %arg8: memref<32x4xbf16, #tpu.memory_space<vmem>>, %arg9: memref<1x4xf32, #tpu.memory_space<vmem>>, %arg10: memref<128x4xf32, #tpu.memory_space<vmem>>) attributes {dimension_semantics = [#tpu.dimension_semantics<parallel>], iteration_bounds = array<i64: 1>, scalar_prefetch = 0 : i64, scratch_operands = 0 : i64, tpu.core_type = #tpu.core_type<tc>, window_params = [{transform_indices = @transform_0, window_bounds = array<i64: 128, 36>}, {pipeline_mode = #tpu.pipeline_mode<synchronous>, transform_indices = @transform_1, window_bounds = array<i64: 36, 32>}, {pipeline_mode = #tpu.pipeline_mode<synchronous>, transform_indices = @transform_2, window_bounds = array<i64: 1, 32>}, {pipeline_mode = #tpu.pipeline_mode<synchronous>, transform_indices = @transform_3, window_bounds = array<i64: 32, 64>}, {pipeline_mode = #tpu.pipeline_mode<synchronous>, transform_indices = @transform_4, window_bounds = array<i64: 1, 64>}, {pipeline_mode = #tpu.pipeline_mode<synchronous>, transform_indices = @transform_5, window_bounds = array<i64: 64, 32>}, {pipeline_mode = #tpu.pipeline_mode<synchronous>, transform_indices = @transform_6, window_bounds = array<i64: 1, 32>}, {pipeline_mode = #tpu.pipeline_mode<synchronous>, transform_indices = @transform_7, window_bounds = array<i64: 32, 4>}, {pipeline_mode = #tpu.pipeline_mode<synchronous>, transform_indices = @transform_8, window_bounds = array<i64: 1, 4>}, {transform_indices = @transform_9, window_bounds = array<i64: 128, 4>}]} {
    %c0 = arith.constant 0 : index
    %c0_0 = arith.constant 0 : index
    %0 = vector.load %arg1[%c0, %c0_0] : memref<128x36xbf16, #tpu.memory_space<vmem>>, vector<128x36xbf16>
    %c0_1 = arith.constant 0 : index
    %c0_2 = arith.constant 0 : index
    %1 = vector.load %arg2[%c0_1, %c0_2] : memref<36x32xbf16, #tpu.memory_space<vmem>>, vector<36x32xbf16>
    %cst = arith.constant dense<0.000000e+00> : vector<128x32xf32>
    %2 = tpu.matmul %0, %1, %cst {dimension_numbers = #tpu.dot_dimension_numbers<[1], [0], [0], [1], [0, 0, 1, 1], [], []>} : vector<128x36xbf16>, vector<36x32xbf16>, vector<128x32xf32> -> vector<128x32xf32>
    %c0_3 = arith.constant 0 : index
    %c0_4 = arith.constant 0 : index
    %3 = vector.load %arg3[%c0_3, %c0_4] : memref<1x32xf32, #tpu.memory_space<vmem>>, vector<1x32xf32>
    %4 = vector.broadcast %3 : vector<1x32xf32> to vector<128x32xf32>
    %5 = arith.addf %2, %4 : vector<128x32xf32>
    %6 = arith.mulf %5, %5 : vector<128x32xf32>
    %7 = arith.mulf %5, %6 : vector<128x32xf32>
    %cst_5 = arith.constant 4.471500e-02 : f32
    %8 = vector.broadcast %cst_5 : f32 to vector<128x32xf32>
    %9 = arith.mulf %8, %7 : vector<128x32xf32>
    %10 = arith.addf %5, %9 : vector<128x32xf32>
    %cst_6 = arith.constant 0.797884583 : f32
    %11 = vector.broadcast %cst_6 : f32 to vector<128x32xf32>
    %12 = arith.mulf %11, %10 : vector<128x32xf32>
    %13 = math.tanh %12 : vector<128x32xf32>
    %cst_7 = arith.constant 1.000000e+00 : f32
    %14 = vector.broadcast %cst_7 : f32 to vector<128x32xf32>
    %15 = arith.addf %14, %13 : vector<128x32xf32>
    %cst_8 = arith.constant 5.000000e-01 : f32
    %16 = vector.broadcast %cst_8 : f32 to vector<128x32xf32>
    %17 = arith.mulf %16, %15 : vector<128x32xf32>
    %18 = arith.mulf %5, %17 : vector<128x32xf32>
    %19 = arith.truncf %18 : vector<128x32xf32> to vector<128x32xbf16>
    %c0_9 = arith.constant 0 : index
    %c0_10 = arith.constant 0 : index
    %20 = vector.load %arg4[%c0_9, %c0_10] : memref<32x64xbf16, #tpu.memory_space<vmem>>, vector<32x64xbf16>
    %cst_11 = arith.constant dense<0.000000e+00> : vector<128x64xf32>
    %21 = tpu.matmul %19, %20, %cst_11 {dimension_numbers = #tpu.dot_dimension_numbers<[1], [0], [0], [1], [0, 0, 1, 1], [], []>} : vector<128x32xbf16>, vector<32x64xbf16>, vector<128x64xf32> -> vector<128x64xf32>
    %c0_12 = arith.constant 0 : index
    %c0_13 = arith.constant 0 : index
    %22 = vector.load %arg5[%c0_12, %c0_13] : memref<1x64xf32, #tpu.memory_space<vmem>>, vector<1x64xf32>
    %23 = vector.broadcast %22 : vector<1x64xf32> to vector<128x64xf32>
    %24 = arith.addf %21, %23 : vector<128x64xf32>
    %25 = arith.mulf %24, %24 : vector<128x64xf32>
    %26 = arith.mulf %24, %25 : vector<128x64xf32>
    %cst_14 = arith.constant 4.471500e-02 : f32
    %27 = vector.broadcast %cst_14 : f32 to vector<128x64xf32>
    %28 = arith.mulf %27, %26 : vector<128x64xf32>
    %29 = arith.addf %24, %28 : vector<128x64xf32>
    %cst_15 = arith.constant 0.797884583 : f32
    %30 = vector.broadcast %cst_15 : f32 to vector<128x64xf32>
    %31 = arith.mulf %30, %29 : vector<128x64xf32>
    %32 = math.tanh %31 : vector<128x64xf32>
    %cst_16 = arith.constant 1.000000e+00 : f32
    %33 = vector.broadcast %cst_16 : f32 to vector<128x64xf32>
    %34 = arith.addf %33, %32 : vector<128x64xf32>
    %cst_17 = arith.constant 5.000000e-01 : f32
    %35 = vector.broadcast %cst_17 : f32 to vector<128x64xf32>
    %36 = arith.mulf %35, %34 : vector<128x64xf32>
    %37 = arith.mulf %24, %36 : vector<128x64xf32>
    %38 = arith.truncf %37 : vector<128x64xf32> to vector<128x64xbf16>
    %c0_18 = arith.constant 0 : index
    %c0_19 = arith.constant 0 : index
    %39 = vector.load %arg6[%c0_18, %c0_19] : memref<64x32xbf16, #tpu.memory_space<vmem>>, vector<64x32xbf16>
    %cst_20 = arith.constant dense<0.000000e+00> : vector<128x32xf32>
    %40 = tpu.matmul %38, %39, %cst_20 {dimension_numbers = #tpu.dot_dimension_numbers<[1], [0], [0], [1], [0, 0, 1, 1], [], []>} : vector<128x64xbf16>, vector<64x32xbf16>, vector<128x32xf32> -> vector<128x32xf32>
    %c0_21 = arith.constant 0 : index
    %c0_22 = arith.constant 0 : index
    %41 = vector.load %arg7[%c0_21, %c0_22] : memref<1x32xf32, #tpu.memory_space<vmem>>, vector<1x32xf32>
    %42 = vector.broadcast %41 : vector<1x32xf32> to vector<128x32xf32>
    %43 = arith.addf %40, %42 : vector<128x32xf32>
    %44 = arith.addf %18, %43 : vector<128x32xf32>
    %45 = arith.truncf %44 : vector<128x32xf32> to vector<128x32xbf16>
    %c0_23 = arith.constant 0 : index
    %c0_24 = arith.constant 0 : index
    %46 = vector.load %arg8[%c0_23, %c0_24] : memref<32x4xbf16, #tpu.memory_space<vmem>>, vector<32x4xbf16>
    %cst_25 = arith.constant dense<0.000000e+00> : vector<128x4xf32>
    %47 = tpu.matmul %45, %46, %cst_25 {dimension_numbers = #tpu.dot_dimension_numbers<[1], [0], [0], [1], [0, 0, 1, 1], [], []>} : vector<128x32xbf16>, vector<32x4xbf16>, vector<128x4xf32> -> vector<128x4xf32>
    %c0_26 = arith.constant 0 : index
    %c0_27 = arith.constant 0 : index
    %48 = vector.load %arg9[%c0_26, %c0_27] : memref<1x4xf32, #tpu.memory_space<vmem>>, vector<1x4xf32>
    %49 = vector.broadcast %48 : vector<1x4xf32> to vector<128x4xf32>
    %50 = arith.addf %47, %49 : vector<128x4xf32>
    %c0_28 = arith.constant 0 : index
    %c0_29 = arith.constant 0 : index
    %51 = vector.load %arg10[%c0_28, %c0_29] : memref<128x4xf32, #tpu.memory_space<vmem>>, vector<128x4xf32>
    tpu.vector_store %arg10[%c0_28, %c0_29], %50 {strides = array<i32>} : memref<128x4xf32, #tpu.memory_space<vmem>>, vector<128x4xf32>,
    return
  }
  func.func @transform_0(%arg0: i32) -> (i32, i32) {
    %c0_i32 = arith.constant 0 : i32
    %c0_i32_0 = arith.constant 0 : i32
    return %arg0, %c0_i32 : i32, i32
  }
  func.func @transform_1(%arg0: i32) -> (i32, i32) {
    %c0_i32 = arith.constant 0 : i32
    %c0_i32_0 = arith.constant 0 : i32
    %c0_i32_1 = arith.constant 0 : i32
    return %c0_i32, %c0_i32_0 : i32, i32
  }
  func.func @transform_2(%arg0: i32) -> (i32, i32) {
    %c0_i32 = arith.constant 0 : i32
    %c0_i32_0 = arith.constant 0 : i32
    %c0_i32_1 = arith.constant 0 : i32
    return %c0_i32, %c0_i32_0 : i32, i32
  }
  func.func @transform_3(%arg0: i32) -> (i32, i32) {
    %c0_i32 = arith.constant 0 : i32
    %c0_i32_0 = arith.constant 0 : i32
    %c0_i32_1 = arith.constant 0 : i32
    return %c0_i32, %c0_i32_0 : i32, i32
  }
  func.func @transform_4(%arg0: i32) -> (i32, i32) {
    %c0_i32 = arith.constant 0 : i32
    %c0_i32_0 = arith.constant 0 : i32
    %c0_i32_1 = arith.constant 0 : i32
    return %c0_i32, %c0_i32_0 : i32, i32
  }
  func.func @transform_5(%arg0: i32) -> (i32, i32) {
    %c0_i32 = arith.constant 0 : i32
    %c0_i32_0 = arith.constant 0 : i32
    %c0_i32_1 = arith.constant 0 : i32
    return %c0_i32, %c0_i32_0 : i32, i32
  }
  func.func @transform_6(%arg0: i32) -> (i32, i32) {
    %c0_i32 = arith.constant 0 : i32
    %c0_i32_0 = arith.constant 0 : i32
    %c0_i32_1 = arith.constant 0 : i32
    return %c0_i32, %c0_i32_0 : i32, i32
  }
  func.func @transform_7(%arg0: i32) -> (i32, i32) {
    %c0_i32 = arith.constant 0 : i32
    %c0_i32_0 = arith.constant 0 : i32
    %c0_i32_1 = arith.constant 0 : i32
    return %c0_i32, %c0_i32_0 : i32, i32
  }
  func.func @transform_8(%arg0: i32) -> (i32, i32) {
    %c0_i32 = arith.constant 0 : i32
    %c0_i32_0 = arith.constant 0 : i32
    %c0_i32_1 = arith.constant 0 : i32
    return %c0_i32, %c0_i32_0 : i32, i32
  }
  func.func @transform_9(%arg0: i32) -> (i32, i32) {
    %c0_i32 = arith.constant 0 : i32
    %c0_i32_0 = arith.constant 0 : i32
    return %arg0, %c0_i32 : i32, i32
  }
}

module attributes {stable_mosaic.version = 11 : i64} {
  func.func @_diffusion_kernel(%arg0: i32, %arg1: memref<1x1x32xbf16, #tpu.memory_space<vmem>>, %arg2: memref<1x10x32xbf16, #tpu.memory_space<vmem>>, %arg3: memref<32x32xbf16, #tpu.memory_space<vmem>>, %arg4: memref<1x32xf32, #tpu.memory_space<vmem>>, %arg5: memref<32x64xbf16, #tpu.memory_space<vmem>>, %arg6: memref<1x64xf32, #tpu.memory_space<vmem>>, %arg7: memref<3x32x256xbf16, #tpu.memory_space<vmem>>, %arg8: memref<1x256xf32, #tpu.memory_space<vmem>>, %arg9: memref<3x256x32xbf16, #tpu.memory_space<vmem>>, %arg10: memref<1x32xf32, #tpu.memory_space<vmem>>, %arg11: memref<1x8x32xf32, #tpu.memory_space<vmem>>) attributes {dimension_semantics = [#tpu.dimension_semantics<parallel>], iteration_bounds = array<i64: 2>, scalar_prefetch = 0 : i64, scratch_operands = 0 : i64, tpu.core_type = #tpu.core_type<tc>, window_params = [{transform_indices = @transform_0, window_bounds = array<i64: 1, 1, 32>}, {transform_indices = @transform_1, window_bounds = array<i64: 1, 10, 32>}, {pipeline_mode = #tpu.pipeline_mode<synchronous>, transform_indices = @transform_2, window_bounds = array<i64: 32, 32>}, {pipeline_mode = #tpu.pipeline_mode<synchronous>, transform_indices = @transform_3, window_bounds = array<i64: 1, 32>}, {pipeline_mode = #tpu.pipeline_mode<synchronous>, transform_indices = @transform_4, window_bounds = array<i64: 32, 64>}, {pipeline_mode = #tpu.pipeline_mode<synchronous>, transform_indices = @transform_5, window_bounds = array<i64: 1, 64>}, {pipeline_mode = #tpu.pipeline_mode<synchronous>, transform_indices = @transform_6, window_bounds = array<i64: 3, 32, 256>}, {pipeline_mode = #tpu.pipeline_mode<synchronous>, transform_indices = @transform_7, window_bounds = array<i64: 1, 256>}, {pipeline_mode = #tpu.pipeline_mode<synchronous>, transform_indices = @transform_8, window_bounds = array<i64: 3, 256, 32>}, {pipeline_mode = #tpu.pipeline_mode<synchronous>, transform_indices = @transform_9, window_bounds = array<i64: 1, 32>}, {transform_indices = @transform_10, window_bounds = array<i64: 1, 8, 32>}]} {
    %c0 = arith.constant 0 : index
    %c0_0 = arith.constant 0 : index
    %c0_1 = arith.constant 0 : index
    %0 = vector.load %arg1[%c0, %c0_0, %c0_1] : memref<1x1x32xbf16, #tpu.memory_space<vmem>>, vector<1x1x32xbf16>
    %1 = vector.shape_cast %0 : vector<1x1x32xbf16> to vector<1x32xbf16>
    %c0_2 = arith.constant 0 : index
    %c0_3 = arith.constant 0 : index
    %2 = vector.load %arg3[%c0_2, %c0_3] : memref<32x32xbf16, #tpu.memory_space<vmem>>, vector<32x32xbf16>
    %cst = arith.constant dense<0.000000e+00> : vector<1x32xf32>
    %3 = tpu.matmul %1, %2, %cst {dimension_numbers = #tpu.dot_dimension_numbers<[1], [0], [0], [1], [0, 0, 1, 1], [], []>} : vector<1x32xbf16>, vector<32x32xbf16>, vector<1x32xf32> -> vector<1x32xf32>
    %c0_4 = arith.constant 0 : index
    %c0_5 = arith.constant 0 : index
    %4 = vector.load %arg4[%c0_4, %c0_5] : memref<1x32xf32, #tpu.memory_space<vmem>>, vector<1x32xf32>
    %5 = arith.addf %3, %4 : vector<1x32xf32>
    %6 = arith.negf %5 : vector<1x32xf32>
    %7 = math.exp %6 : vector<1x32xf32>
    %cst_6 = arith.constant 1.000000e+00 : f32
    %8 = vector.broadcast %cst_6 : f32 to vector<1x32xf32>
    %9 = arith.addf %8, %7 : vector<1x32xf32>
    %10 = arith.divf %8, %9 : vector<1x32xf32>
    %11 = arith.mulf %5, %10 : vector<1x32xf32>
    %12 = arith.truncf %11 : vector<1x32xf32> to vector<1x32xbf16>
    %c0_7 = arith.constant 0 : index
    %c0_8 = arith.constant 0 : index
    %13 = vector.load %arg5[%c0_7, %c0_8] : memref<32x64xbf16, #tpu.memory_space<vmem>>, vector<32x64xbf16>
    %cst_9 = arith.constant dense<0.000000e+00> : vector<1x64xf32>
    %14 = tpu.matmul %12, %13, %cst_9 {dimension_numbers = #tpu.dot_dimension_numbers<[1], [0], [0], [1], [0, 0, 1, 1], [], []>} : vector<1x32xbf16>, vector<32x64xbf16>, vector<1x64xf32> -> vector<1x64xf32>
    %c0_10 = arith.constant 0 : index
    %c0_11 = arith.constant 0 : index
    %15 = vector.load %arg6[%c0_10, %c0_11] : memref<1x64xf32, #tpu.memory_space<vmem>>, vector<1x64xf32>
    %16 = arith.addf %14, %15 : vector<1x64xf32>
    %17 = vector.extract_strided_slice %16 {offsets = [0, 0], sizes = [1, 32], strides = [1, 1]} : vector<1x64xf32> to vector<1x32xf32>
    %18 = tpu.concatenate %17, %17, %17, %17, %17, %17, %17, %17 in 1 : vector<1x32xf32>, vector<1x32xf32>, vector<1x32xf32>, vector<1x32xf32>, vector<1x32xf32>, vector<1x32xf32>, vector<1x32xf32>, vector<1x32xf32> -> vector<1x256xf32>
    %19 = vector.extract_strided_slice %16 {offsets = [0, 32], sizes = [1, 32], strides = [1, 1]} : vector<1x64xf32> to vector<1x32xf32>
    %20 = tpu.concatenate %19, %19, %19, %19, %19, %19, %19, %19 in 1 : vector<1x32xf32>, vector<1x32xf32>, vector<1x32xf32>, vector<1x32xf32>, vector<1x32xf32>, vector<1x32xf32>, vector<1x32xf32>, vector<1x32xf32> -> vector<1x256xf32>
    %c0_12 = arith.constant 0 : index
    %c0_13 = arith.constant 0 : index
    %c0_14 = arith.constant 0 : index
    %21 = vector.load %arg2[%c0_12, %c0_13, %c0_14] : memref<1x10x32xbf16, #tpu.memory_space<vmem>>, vector<1x10x32xbf16>
    %22 = vector.shape_cast %21 : vector<1x10x32xbf16> to vector<10x32xbf16>
    %23 = vector.extract_strided_slice %22 {offsets = [0, 0], sizes = [8, 32], strides = [1, 1]} : vector<10x32xbf16> to vector<8x32xbf16>
    %c0_15 = arith.constant 0 : index
    %c0_16 = arith.constant 0 : index
    %c0_17 = arith.constant 0 : index
    %24 = vector.load %arg7[%c0_15, %c0_16, %c0_17] : memref<3x32x256xbf16, #tpu.memory_space<vmem>>, vector<1x32x256xbf16>
    %25 = vector.shape_cast %24 : vector<1x32x256xbf16> to vector<32x256xbf16>
    %cst_18 = arith.constant dense<0.000000e+00> : vector<8x256xf32>
    %26 = tpu.matmul %23, %25, %cst_18 {dimension_numbers = #tpu.dot_dimension_numbers<[1], [0], [0], [1], [0, 0, 1, 1], [], []>} : vector<8x32xbf16>, vector<32x256xbf16>, vector<8x256xf32> -> vector<8x256xf32>
    %27 = vector.extract_strided_slice %22 {offsets = [1, 0], sizes = [8, 32], strides = [1, 1]} : vector<10x32xbf16> to vector<8x32xbf16>
    %c1 = arith.constant 1 : index
    %c0_19 = arith.constant 0 : index
    %c0_20 = arith.constant 0 : index
    %28 = vector.load %arg7[%c1, %c0_19, %c0_20] : memref<3x32x256xbf16, #tpu.memory_space<vmem>>, vector<1x32x256xbf16>
    %29 = vector.shape_cast %28 : vector<1x32x256xbf16> to vector<32x256xbf16>
    %cst_21 = arith.constant dense<0.000000e+00> : vector<8x256xf32>
    %30 = tpu.matmul %27, %29, %cst_21 {dimension_numbers = #tpu.dot_dimension_numbers<[1], [0], [0], [1], [0, 0, 1, 1], [], []>} : vector<8x32xbf16>, vector<32x256xbf16>, vector<8x256xf32> -> vector<8x256xf32>
    %31 = arith.addf %26, %30 : vector<8x256xf32>
    %32 = vector.extract_strided_slice %22 {offsets = [2, 0], sizes = [8, 32], strides = [1, 1]} : vector<10x32xbf16> to vector<8x32xbf16>
    %c2 = arith.constant 2 : index
    %c0_22 = arith.constant 0 : index
    %c0_23 = arith.constant 0 : index
    %33 = vector.load %arg7[%c2, %c0_22, %c0_23] : memref<3x32x256xbf16, #tpu.memory_space<vmem>>, vector<1x32x256xbf16>
    %34 = vector.shape_cast %33 : vector<1x32x256xbf16> to vector<32x256xbf16>
    %cst_24 = arith.constant dense<0.000000e+00> : vector<8x256xf32>
    %35 = tpu.matmul %32, %34, %cst_24 {dimension_numbers = #tpu.dot_dimension_numbers<[1], [0], [0], [1], [0, 0, 1, 1], [], []>} : vector<8x32xbf16>, vector<32x256xbf16>, vector<8x256xf32> -> vector<8x256xf32>
    %36 = arith.addf %31, %35 : vector<8x256xf32>
    %c0_25 = arith.constant 0 : index
    %c0_26 = arith.constant 0 : index
    %37 = vector.load %arg8[%c0_25, %c0_26] : memref<1x256xf32, #tpu.memory_space<vmem>>, vector<1x256xf32>
    %38 = vector.broadcast %37 : vector<1x256xf32> to vector<8x256xf32>
    %39 = arith.addf %36, %38 : vector<8x256xf32>
    %cst_27 = arith.constant 1.000000e+00 : f32
    %40 = vector.broadcast %cst_27 : f32 to vector<1x256xf32>
    %41 = arith.addf %40, %18 : vector<1x256xf32>
    %42 = vector.broadcast %41 : vector<1x256xf32> to vector<8x256xf32>
    %43 = arith.mulf %39, %42 : vector<8x256xf32>
    %44 = vector.broadcast %20 : vector<1x256xf32> to vector<8x256xf32>
    %45 = arith.addf %43, %44 : vector<8x256xf32>
    %46 = arith.mulf %45, %45 : vector<8x256xf32>
    %47 = arith.mulf %45, %46 : vector<8x256xf32>
    %cst_28 = arith.constant 4.471500e-02 : f32
    %48 = vector.broadcast %cst_28 : f32 to vector<8x256xf32>
    %49 = arith.mulf %48, %47 : vector<8x256xf32>
    %50 = arith.addf %45, %49 : vector<8x256xf32>
    %cst_29 = arith.constant 0.797884583 : f32
    %51 = vector.broadcast %cst_29 : f32 to vector<8x256xf32>
    %52 = arith.mulf %51, %50 : vector<8x256xf32>
    %53 = math.tanh %52 : vector<8x256xf32>
    %cst_30 = arith.constant 1.000000e+00 : f32
    %54 = vector.broadcast %cst_30 : f32 to vector<8x256xf32>
    %55 = arith.addf %54, %53 : vector<8x256xf32>
    %cst_31 = arith.constant 5.000000e-01 : f32
    %56 = vector.broadcast %cst_31 : f32 to vector<8x256xf32>
    %57 = arith.mulf %56, %55 : vector<8x256xf32>
    %58 = arith.mulf %45, %57 : vector<8x256xf32>
    %cst_32 = arith.constant 0.000000e+00 : f32
    %59 = vector.broadcast %cst_32 : f32 to vector<1x256xf32>
    %60 = tpu.concatenate %59, %58, %59 in 0 : vector<1x256xf32>, vector<8x256xf32>, vector<1x256xf32> -> vector<10x256xf32>
    %61 = arith.truncf %60 : vector<10x256xf32> to vector<10x256xbf16>
    %62 = vector.extract_strided_slice %61 {offsets = [0, 0], sizes = [8, 256], strides = [1, 1]} : vector<10x256xbf16> to vector<8x256xbf16>
    %c0_33 = arith.constant 0 : index
    %c0_34 = arith.constant 0 : index
    %c0_35 = arith.constant 0 : index
    %63 = vector.load %arg9[%c0_33, %c0_34, %c0_35] : memref<3x256x32xbf16, #tpu.memory_space<vmem>>, vector<1x256x32xbf16>
    %64 = vector.shape_cast %63 : vector<1x256x32xbf16> to vector<256x32xbf16>
    %cst_36 = arith.constant dense<0.000000e+00> : vector<8x32xf32>
    %65 = tpu.matmul %62, %64, %cst_36 {dimension_numbers = #tpu.dot_dimension_numbers<[1], [0], [0], [1], [0, 0, 1, 1], [], []>} : vector<8x256xbf16>, vector<256x32xbf16>, vector<8x32xf32> -> vector<8x32xf32>
    %66 = vector.extract_strided_slice %61 {offsets = [1, 0], sizes = [8, 256], strides = [1, 1]} : vector<10x256xbf16> to vector<8x256xbf16>
    %c1_37 = arith.constant 1 : index
    %c0_38 = arith.constant 0 : index
    %c0_39 = arith.constant 0 : index
    %67 = vector.load %arg9[%c1_37, %c0_38, %c0_39] : memref<3x256x32xbf16, #tpu.memory_space<vmem>>, vector<1x256x32xbf16>
    %68 = vector.shape_cast %67 : vector<1x256x32xbf16> to vector<256x32xbf16>
    %cst_40 = arith.constant dense<0.000000e+00> : vector<8x32xf32>
    %69 = tpu.matmul %66, %68, %cst_40 {dimension_numbers = #tpu.dot_dimension_numbers<[1], [0], [0], [1], [0, 0, 1, 1], [], []>} : vector<8x256xbf16>, vector<256x32xbf16>, vector<8x32xf32> -> vector<8x32xf32>
    %70 = arith.addf %65, %69 : vector<8x32xf32>
    %71 = vector.extract_strided_slice %61 {offsets = [2, 0], sizes = [8, 256], strides = [1, 1]} : vector<10x256xbf16> to vector<8x256xbf16>
    %c2_41 = arith.constant 2 : index
    %c0_42 = arith.constant 0 : index
    %c0_43 = arith.constant 0 : index
    %72 = vector.load %arg9[%c2_41, %c0_42, %c0_43] : memref<3x256x32xbf16, #tpu.memory_space<vmem>>, vector<1x256x32xbf16>
    %73 = vector.shape_cast %72 : vector<1x256x32xbf16> to vector<256x32xbf16>
    %cst_44 = arith.constant dense<0.000000e+00> : vector<8x32xf32>
    %74 = tpu.matmul %71, %73, %cst_44 {dimension_numbers = #tpu.dot_dimension_numbers<[1], [0], [0], [1], [0, 0, 1, 1], [], []>} : vector<8x256xbf16>, vector<256x32xbf16>, vector<8x32xf32> -> vector<8x32xf32>
    %75 = arith.addf %70, %74 : vector<8x32xf32>
    %c0_45 = arith.constant 0 : index
    %c0_46 = arith.constant 0 : index
    %76 = vector.load %arg10[%c0_45, %c0_46] : memref<1x32xf32, #tpu.memory_space<vmem>>, vector<1x32xf32>
    %77 = vector.broadcast %76 : vector<1x32xf32> to vector<8x32xf32>
    %78 = arith.addf %75, %77 : vector<8x32xf32>
    %c0_47 = arith.constant 0 : index
    %c0_48 = arith.constant 0 : index
    %c0_49 = arith.constant 0 : index
    %79 = vector.load %arg11[%c0_47, %c0_48, %c0_49] : memref<1x8x32xf32, #tpu.memory_space<vmem>>, vector<1x8x32xf32>
    %80 = vector.shape_cast %79 : vector<1x8x32xf32> to vector<8x32xf32>
    %81 = vector.shape_cast %78 : vector<8x32xf32> to vector<1x8x32xf32>
    tpu.vector_store %arg11[%c0_47, %c0_48, %c0_49], %81 {strides = array<i32>} : memref<1x8x32xf32, #tpu.memory_space<vmem>>, vector<1x8x32xf32>,
    return
  }
  func.func @transform_0(%arg0: i32) -> (i32, i32, i32) {
    %c0_i32 = arith.constant 0 : i32
    %c0_i32_0 = arith.constant 0 : i32
    %c0_i32_1 = arith.constant 0 : i32
    return %arg0, %c0_i32, %c0_i32_0 : i32, i32, i32
  }
  func.func @transform_1(%arg0: i32) -> (i32, i32, i32) {
    %c0_i32 = arith.constant 0 : i32
    %c0_i32_0 = arith.constant 0 : i32
    %c0_i32_1 = arith.constant 0 : i32
    return %arg0, %c0_i32, %c0_i32_0 : i32, i32, i32
  }
  func.func @transform_2(%arg0: i32) -> (i32, i32) {
    %c0_i32 = arith.constant 0 : i32
    %c0_i32_0 = arith.constant 0 : i32
    %c0_i32_1 = arith.constant 0 : i32
    return %c0_i32, %c0_i32_0 : i32, i32
  }
  func.func @transform_3(%arg0: i32) -> (i32, i32) {
    %c0_i32 = arith.constant 0 : i32
    %c0_i32_0 = arith.constant 0 : i32
    %c0_i32_1 = arith.constant 0 : i32
    return %c0_i32, %c0_i32_0 : i32, i32
  }
  func.func @transform_4(%arg0: i32) -> (i32, i32) {
    %c0_i32 = arith.constant 0 : i32
    %c0_i32_0 = arith.constant 0 : i32
    %c0_i32_1 = arith.constant 0 : i32
    return %c0_i32, %c0_i32_0 : i32, i32
  }
  func.func @transform_5(%arg0: i32) -> (i32, i32) {
    %c0_i32 = arith.constant 0 : i32
    %c0_i32_0 = arith.constant 0 : i32
    %c0_i32_1 = arith.constant 0 : i32
    return %c0_i32, %c0_i32_0 : i32, i32
  }
  func.func @transform_6(%arg0: i32) -> (i32, i32, i32) {
    %c0_i32 = arith.constant 0 : i32
    %c0_i32_0 = arith.constant 0 : i32
    %c0_i32_1 = arith.constant 0 : i32
    %c0_i32_2 = arith.constant 0 : i32
    return %c0_i32, %c0_i32_0, %c0_i32_1 : i32, i32, i32
  }
  func.func @transform_7(%arg0: i32) -> (i32, i32) {
    %c0_i32 = arith.constant 0 : i32
    %c0_i32_0 = arith.constant 0 : i32
    %c0_i32_1 = arith.constant 0 : i32
    return %c0_i32, %c0_i32_0 : i32, i32
  }
  func.func @transform_8(%arg0: i32) -> (i32, i32, i32) {
    %c0_i32 = arith.constant 0 : i32
    %c0_i32_0 = arith.constant 0 : i32
    %c0_i32_1 = arith.constant 0 : i32
    %c0_i32_2 = arith.constant 0 : i32
    return %c0_i32, %c0_i32_0, %c0_i32_1 : i32, i32, i32
  }
  func.func @transform_9(%arg0: i32) -> (i32, i32) {
    %c0_i32 = arith.constant 0 : i32
    %c0_i32_0 = arith.constant 0 : i32
    %c0_i32_1 = arith.constant 0 : i32
    return %c0_i32, %c0_i32_0 : i32, i32
  }
  func.func @transform_10(%arg0: i32) -> (i32, i32, i32) {
    %c0_i32 = arith.constant 0 : i32
    %c0_i32_0 = arith.constant 0 : i32
    %c0_i32_1 = arith.constant 0 : i32
    return %arg0, %c0_i32, %c0_i32_0 : i32, i32, i32
  }
}

</mosaic_0001>

<llo_original>
// kernel: stable_diffusion_with_hybrid_encoder.2
$region0: #{stable_diffusion_with_hybrid_encoder.2}
  #allocation0 [shape = 'u32[]', space=smem, size = 0x4, offset = 0x4, fixed_abs, tag = 'smem constant byte address 0x4 - core index']
  #allocation1 [shape = 'u32[72,128]{1,0:T(1,128)}', space=vmem, size = 0x9000, scoped, tag = 'internal scratch']
  %s0 = inlined_call_operand.vmem [shape: bf16[128,36], index: 0, kind: input, shape index: {}]
  %s1 = inlined_call_operand.vmem [shape: bf16[36,32], index: 1, kind: input, shape index: {}]
  %s2 = inlined_call_operand.vmem [shape: f32[1,32], index: 2, kind: input, shape index: {}]
  %s3 = inlined_call_operand.vmem [shape: bf16[32,64], index: 3, kind: input, shape index: {}]
  %s4 = inlined_call_operand.vmem [shape: f32[1,64], index: 4, kind: input, shape index: {}]
  %s5 = inlined_call_operand.vmem [shape: bf16[64,32], index: 5, kind: input, shape index: {}]
  %s6 = inlined_call_operand.vmem [shape: f32[1,32], index: 6, kind: input, shape index: {}]
  %s7 = inlined_call_operand.vmem [shape: bf16[32,4], index: 7, kind: input, shape index: {}]
  %s8 = inlined_call_operand.vmem [shape: f32[1,4], index: 8, kind: input, shape index: {}]
  %s9 = inlined_call_operand.vmem [shape: f32[128,4], index: 9, kind: output, shape index: {}]
  %s10 = sld [smem:[#allocation0]]
  $region46: #{stable_diffusion_with_hybrid_encoder.2} parent=0
    _
  %s12 = ssub.s32 1, %s10
  %s13 = scalar_select 0, %s12, %s10
  // Predicated region
  $region2: #{stable_diffusion_with_hybrid_encoder.2} parent=0 // pred_check
    _
  $region3: #{stable_diffusion_with_hybrid_encoder.2} parent=0 // pred_check_branch
    %15 = sbr.rel (0) target = $region5
  $region4: #{stable_diffusion_with_hybrid_encoder.2} parent=0 // pred_region
    _
  $region5: #{stable_diffusion_with_hybrid_encoder.2} parent=0 // pred_fallthru
    _
  // Predicated region
  $region6: #{stable_diffusion_with_hybrid_encoder.2} parent=0 // pred_check
    _
  $region7: #{stable_diffusion_with_hybrid_encoder.2} parent=0 // pred_check_branch
    %17 = sbr.rel (0) target = $region9
  $region8: #{stable_diffusion_with_hybrid_encoder.2} parent=0 // pred_region
    _
  $region9: #{stable_diffusion_with_hybrid_encoder.2} parent=0 // pred_fallthru
    _
  // Predicated region
  $region10: #{stable_diffusion_with_hybrid_encoder.2} parent=0 // pred_check
    _
  $region11: #{stable_diffusion_with_hybrid_encoder.2} parent=0 // pred_check_branch
    %19 = sbr.rel (0) target = $region13
  $region12: #{stable_diffusion_with_hybrid_encoder.2} parent=0 // pred_region
    _
  $region13: #{stable_diffusion_with_hybrid_encoder.2} parent=0 // pred_fallthru
    _
  // Predicated region
  $region14: #{stable_diffusion_with_hybrid_encoder.2} parent=0 // pred_check
    _
  $region15: #{stable_diffusion_with_hybrid_encoder.2} parent=0 // pred_check_branch
    %21 = sbr.rel (0) target = $region17
  $region16: #{stable_diffusion_with_hybrid_encoder.2} parent=0 // pred_region
    _
  $region17: #{stable_diffusion_with_hybrid_encoder.2} parent=0 // pred_fallthru
    _
  // Predicated region
  $region18: #{stable_diffusion_with_hybrid_encoder.2} parent=0 // pred_check
    _
  $region19: #{stable_diffusion_with_hybrid_encoder.2} parent=0 // pred_check_branch
    %23 = sbr.rel (0) target = $region21
  $region20: #{stable_diffusion_with_hybrid_encoder.2} parent=0 // pred_region
    _
  $region21: #{stable_diffusion_with_hybrid_encoder.2} parent=0 // pred_fallthru
    _
  // Predicated region
  $region22: #{stable_diffusion_with_hybrid_encoder.2} parent=0 // pred_check
    _
  $region23: #{stable_diffusion_with_hybrid_encoder.2} parent=0 // pred_check_branch
    %25 = sbr.rel (0) target = $region25
  $region24: #{stable_diffusion_with_hybrid_encoder.2} parent=0 // pred_region
    _
  $region25: #{stable_diffusion_with_hybrid_encoder.2} parent=0 // pred_fallthru
    _
  // Predicated region
  $region26: #{stable_diffusion_with_hybrid_encoder.2} parent=0 // pred_check
    _
  $region27: #{stable_diffusion_with_hybrid_encoder.2} parent=0 // pred_check_branch
    %27 = sbr.rel (0) target = $region29
  $region28: #{stable_diffusion_with_hybrid_encoder.2} parent=0 // pred_region
    _
  $region29: #{stable_diffusion_with_hybrid_encoder.2} parent=0 // pred_fallthru
    _
  // Predicated region
  $region30: #{stable_diffusion_with_hybrid_encoder.2} parent=0 // pred_check
    _
  $region31: #{stable_diffusion_with_hybrid_encoder.2} parent=0 // pred_check_branch
    %29 = sbr.rel (0) target = $region33
  $region32: #{stable_diffusion_with_hybrid_encoder.2} parent=0 // pred_region
    _
  $region33: #{stable_diffusion_with_hybrid_encoder.2} parent=0 // pred_fallthru
    _
  // Predicated region
  $region34: #{stable_diffusion_with_hybrid_encoder.2} parent=0 // pred_check
    _
  $region35: #{stable_diffusion_with_hybrid_encoder.2} parent=0 // pred_check_branch
    %31 = sbr.rel (0) target = $region37
  $region36: #{stable_diffusion_with_hybrid_encoder.2} parent=0 // pred_region
    _
  $region37: #{stable_diffusion_with_hybrid_encoder.2} parent=0 // pred_fallthru
    _
  %v33 = vld [vmem:[%s0] sm:$0xf]
  %v34 = vld [vmem:[%s0 + $0x4] sm:$0xf]
  %v35 = vld [vmem:[%s0 + $0x8] sm:$0xf]
  %v36 = vld [vmem:[%s0 + $0xc] sm:$0xf]
  %v37 = vld [vmem:[%s0 + $0x10] sm:$0xf]
  %v38 = vld [vmem:[%s0 + $0x14] sm:$0xf]
  %v39 = vld [vmem:[%s0 + $0x18] sm:$0xf]
  %v40 = vld [vmem:[%s0 + $0x1c] sm:$0xf]
  %v41 = vld [vmem:[%s0 + $0x20] sm:$0xf]
  %v42 = vld [vmem:[%s0 + $0x24] sm:$0xf]
  %v43 = vld [vmem:[%s0 + $0x28] sm:$0xf]
  %v44 = vld [vmem:[%s0 + $0x2c] sm:$0xf]
  %v45 = vld [vmem:[%s0 + $0x30] sm:$0xf]
  %v46 = vld [vmem:[%s0 + $0x34] sm:$0xf]
  %v47 = vld [vmem:[%s0 + $0x38] sm:$0xf]
  %v48 = vld [vmem:[%s0 + $0x3c] sm:$0xf]
  %v49 = vld [vmem:[%s1] sm:$0xf]
  %v50 = vld [vmem:[%s1 + $0x4] sm:$0xf]
  %v51 = vld [vmem:[%s1 + $0x8] sm:$0xf]
  %v52 = vld [vmem:[%s1 + $0xc] sm:$0xf]
  %v53 = vld [vmem:[%s1 + $0x10] sm:$0x3]
  %v54 = vld [vmem:[%s2] sm:$0x1]
  %v56 = vperm.slane %v54, 0
  %v74 = vunpack.c.l.b16 %v33
  %v75 = vunpack.c.l.b16 %v34
  %v76 = vunpack.c.l.b16 %v35
  %v77 = vunpack.c.l.b16 %v36
  %v78 = vunpack.c.l.b16 %v37
  %v79 = vunpack.c.l.b16 %v38
  %v80 = vunpack.c.l.b16 %v39
  %v81 = vunpack.c.l.b16 %v40
  %v82 = vunpack.c.l.b16 %v41
  %v83 = vunpack.c.l.b16 %v42
  %v84 = vunpack.c.l.b16 %v43
  %v85 = vunpack.c.l.b16 %v44
  %v86 = vunpack.c.l.b16 %v45
  %v87 = vunpack.c.l.b16 %v46
  %v88 = vunpack.c.l.b16 %v47
  %v89 = vunpack.c.l.b16 %v48
  %v90 = vpack.c.b16 %v75, %v74
  %v91 = vpack.c.b16 %v77, %v76
  %v92 = vpack.c.b16 %v79, %v78
  %v93 = vpack.c.b16 %v81, %v80
  %v94 = vpack.c.b16 %v83, %v82
  %v95 = vpack.c.b16 %v85, %v84
  %v96 = vpack.c.b16 %v87, %v86
  %v97 = vpack.c.b16 %v89, %v88
  %v103 = vunpack.c.l.b16 %v49
  %v104 = vunpack.c.l.b16 %v50
  %v105 = vunpack.c.l.b16 %v51
  %v106 = vunpack.c.l.b16 %v52
  %v107 = vunpack.c.l.b16 %v53
  %v108 = vpack.c.b16 %v104, %v103
  %v109 = vpack.c.b16 %v106, %v105
  %v110 = vpack.c.b16 %v107, %v107
  %vm113 = vcmask 293888
  %v115 = vsel %vm113, %v90, 0
  %v118 = vsel %vm113, %v91, 0
  %v121 = vsel %vm113, %v92, 0
  %v124 = vsel %vm113, %v93, 0
  %v127 = vsel %vm113, %v94, 0
  %v130 = vsel %vm113, %v95, 0
  %v133 = vsel %vm113, %v96, 0
  %v136 = vsel %vm113, %v97, 0
  %vm138 = vcmask 1041408
  %v140 = vsel %vm138, %v110, 0
  %142 = vmatpush.bf16.msra.mxu0 0
  %143 = vmatpush.bf16.msra.mxu0 0
  %144 = vmatpush.bf16.msra.mxu0 0
  %145 = vmatpush.bf16.msra.mxu0 0
  %146 = vmatpush.bf16.msra.mxu0 0
  %147 = vmatpush.bf16.msra.mxu0 %v140
  %148 = vmatpush.bf16.msra.mxu0 %v109
  %149 = vmatpush.bf16.msra.mxu0 %v108
  %150 = vmatmul.bf16.gmra.mxu0 %v115
  %v151 = vpop.f32.mrf.mxu0
  %v152 = vadd.f32 %v56, %v151
  %v153 = vpop.f32.mrf.mxu0
  %v154 = vadd.f32 %v56, %v153
  %155 = vmatmul.bf16.gmra.mxu0 %v118
  %v156 = vpop.f32.mrf.mxu0
  %v157 = vadd.f32 %v56, %v156
  %v158 = vpop.f32.mrf.mxu0
  %v159 = vadd.f32 %v56, %v158
  %160 = vmatmul.bf16.gmra.mxu0 %v121
  %v161 = vpop.f32.mrf.mxu0
  %v162 = vadd.f32 %v56, %v161
  %v163 = vpop.f32.mrf.mxu0
  %v164 = vadd.f32 %v56, %v163
  %165 = vmatmul.bf16.gmra.mxu0 %v124
  %v166 = vpop.f32.mrf.mxu0
  %v167 = vadd.f32 %v56, %v166
  %v168 = vpop.f32.mrf.mxu0
  %v169 = vadd.f32 %v56, %v168
  %170 = vmatmul.bf16.gmra.mxu0 %v127
  %v171 = vpop.f32.mrf.mxu0
  %v172 = vadd.f32 %v56, %v171
  %v173 = vpop.f32.mrf.mxu0
  %v174 = vadd.f32 %v56, %v173
  %175 = vmatmul.bf16.gmra.mxu0 %v130
  %v176 = vpop.f32.mrf.mxu0
  %v177 = vadd.f32 %v56, %v176
  %v178 = vpop.f32.mrf.mxu0
  %v179 = vadd.f32 %v56, %v178
  %180 = vmatmul.bf16.gmra.mxu0 %v133
  %v181 = vpop.f32.mrf.mxu0
  %v182 = vadd.f32 %v56, %v181
  %v183 = vpop.f32.mrf.mxu0
  %v184 = vadd.f32 %v56, %v183
  %185 = vmatmul.bf16.gmra.mxu0 %v136
  %v186 = vpop.f32.mrf.mxu0
  %v187 = vadd.f32 %v56, %v186
  %v188 = vpop.f32.mrf.mxu0
  %v189 = vadd.f32 %v56, %v188
  %190 = vdwg.mxu0
  %v191 = vmul.f32 %v152, %v152
  %v192 = vmul.f32 %v154, %v154
  %v193 = vmul.f32 %v157, %v157
  %v194 = vmul.f32 %v159, %v159
  %v195 = vmul.f32 %v162, %v162
  %v196 = vmul.f32 %v164, %v164
  %v197 = vmul.f32 %v167, %v167
  %v198 = vmul.f32 %v169, %v169
  %v199 = vmul.f32 %v172, %v172
  %v200 = vmul.f32 %v174, %v174
  %v201 = vmul.f32 %v177, %v177
  %v202 = vmul.f32 %v179, %v179
  %v203 = vmul.f32 %v182, %v182
  %v204 = vmul.f32 %v184, %v184
  %v205 = vmul.f32 %v187, %v187
  %v206 = vmul.f32 %v189, %v189
  %v207 = vmul.f32 %v152, %v191
  %v208 = vmul.f32 %v154, %v192
  %v209 = vmul.f32 %v157, %v193
  %v210 = vmul.f32 %v159, %v194
  %v211 = vmul.f32 %v162, %v195
  %v212 = vmul.f32 %v164, %v196
  %v213 = vmul.f32 %v167, %v197
  %v214 = vmul.f32 %v169, %v198
  %v215 = vmul.f32 %v172, %v199
  %v216 = vmul.f32 %v174, %v200
  %v217 = vmul.f32 %v177, %v201
  %v218 = vmul.f32 %v179, %v202
  %v219 = vmul.f32 %v182, %v203
  %v220 = vmul.f32 %v184, %v204
  %v221 = vmul.f32 %v187, %v205
  %v222 = vmul.f32 %v189, %v206
  %v223 = vmul.f32 %v207, 0.044715
  %v224 = vmul.f32 %v208, 0.044715
  %v225 = vmul.f32 %v209, 0.044715
  %v226 = vmul.f32 %v210, 0.044715
  %v227 = vmul.f32 %v211, 0.044715
  %v228 = vmul.f32 %v212, 0.044715
  %v229 = vmul.f32 %v213, 0.044715
  %v230 = vmul.f32 %v214, 0.044715
  %v231 = vmul.f32 %v215, 0.044715
  %v232 = vmul.f32 %v216, 0.044715
  %v233 = vmul.f32 %v217, 0.044715
  %v234 = vmul.f32 %v218, 0.044715
  %v235 = vmul.f32 %v219, 0.044715
  %v236 = vmul.f32 %v220, 0.044715
  %v237 = vmul.f32 %v221, 0.044715
  %v238 = vmul.f32 %v222, 0.044715
  %v239 = vadd.f32 %v152, %v223
  %v240 = vadd.f32 %v154, %v224
  %v241 = vadd.f32 %v157, %v225
  %v242 = vadd.f32 %v159, %v226
  %v243 = vadd.f32 %v162, %v227
  %v244 = vadd.f32 %v164, %v228
  %v245 = vadd.f32 %v167, %v229
  %v246 = vadd.f32 %v169, %v230
  %v247 = vadd.f32 %v172, %v231
  %v248 = vadd.f32 %v174, %v232
  %v249 = vadd.f32 %v177, %v233
  %v250 = vadd.f32 %v179, %v234
  %v251 = vadd.f32 %v182, %v235
  %v252 = vadd.f32 %v184, %v236
  %v253 = vadd.f32 %v187, %v237
  %v254 = vadd.f32 %v189, %v238
  %v255 = vmul.f32 %v239, 0.7978846
  %v256 = vmul.f32 %v240, 0.7978846
  %v257 = vmul.f32 %v241, 0.7978846
  %v258 = vmul.f32 %v242, 0.7978846
  %v259 = vmul.f32 %v243, 0.7978846
  %v260 = vmul.f32 %v244, 0.7978846
  %v261 = vmul.f32 %v245, 0.7978846
  %v262 = vmul.f32 %v246, 0.7978846
  %v263 = vmul.f32 %v247, 0.7978846
  %v264 = vmul.f32 %v248, 0.7978846
  %v265 = vmul.f32 %v249, 0.7978846
  %v266 = vmul.f32 %v250, 0.7978846
  %v267 = vmul.f32 %v251, 0.7978846
  %v268 = vmul.f32 %v252, 0.7978846
  %v269 = vmul.f32 %v253, 0.7978846
  %v270 = vmul.f32 %v254, 0.7978846
  %v271 = vtanh.pop %v255
  %v272 = vtanh.pop %v256
  %v273 = vtanh.pop %v257
  %v274 = vtanh.pop %v258
  %v275 = vtanh.pop %v259
  %v276 = vtanh.pop %v260
  %v277 = vtanh.pop %v261
  %v278 = vtanh.pop %v262
  %v279 = vtanh.pop %v263
  %v280 = vtanh.pop %v264
  %v281 = vtanh.pop %v265
  %v282 = vtanh.pop %v266
  %v283 = vtanh.pop %v267
  %v284 = vtanh.pop %v268
  %v285 = vtanh.pop %v269
  %v286 = vtanh.pop %v270
  %v287 = vadd.f32 %v271, 1.0
  %v288 = vadd.f32 %v272, 1.0
  %v289 = vadd.f32 %v273, 1.0
  %v290 = vadd.f32 %v274, 1.0
  %v291 = vadd.f32 %v275, 1.0
  %v292 = vadd.f32 %v276, 1.0
  %v293 = vadd.f32 %v277, 1.0
  %v294 = vadd.f32 %v278, 1.0
  %v295 = vadd.f32 %v279, 1.0
  %v296 = vadd.f32 %v280, 1.0
  %v297 = vadd.f32 %v281, 1.0
  %v298 = vadd.f32 %v282, 1.0
  %v299 = vadd.f32 %v283, 1.0
  %v300 = vadd.f32 %v284, 1.0
  %v301 = vadd.f32 %v285, 1.0
  %v302 = vadd.f32 %v286, 1.0
  %v303 = vmul.f32 %v287, 0.5
  %v304 = vmul.f32 %v288, 0.5
  %v305 = vmul.f32 %v289, 0.5
  %v306 = vmul.f32 %v290, 0.5
  %v307 = vmul.f32 %v291, 0.5
  %v308 = vmul.f32 %v292, 0.5
  %v309 = vmul.f32 %v293, 0.5
  %v310 = vmul.f32 %v294, 0.5
  %v311 = vmul.f32 %v295, 0.5
  %v312 = vmul.f32 %v296, 0.5
  %v313 = vmul.f32 %v297, 0.5
  %v314 = vmul.f32 %v298, 0.5
  %v315 = vmul.f32 %v299, 0.5
  %v316 = vmul.f32 %v300, 0.5
  %v317 = vmul.f32 %v301, 0.5
  %v318 = vmul.f32 %v302, 0.5
  %v319 = vmul.f32 %v152, %v303
  %v320 = vmul.f32 %v154, %v304
  %v321 = vmul.f32 %v157, %v305
  %v322 = vmul.f32 %v159, %v306
  %v323 = vmul.f32 %v162, %v307
  %v324 = vmul.f32 %v164, %v308
  %v325 = vmul.f32 %v167, %v309
  %v326 = vmul.f32 %v169, %v310
  %v327 = vmul.f32 %v172, %v311
  %v328 = vmul.f32 %v174, %v312
  %v329 = vmul.f32 %v177, %v313
  %v330 = vmul.f32 %v179, %v314
  %v331 = vmul.f32 %v182, %v315
  %v332 = vmul.f32 %v184, %v316
  %v333 = vmul.f32 %v187, %v317
  %v334 = vmul.f32 %v189, %v318
  %v335 = vpack.c.bf16 %v320, %v319
  %v336 = vpack.c.bf16 %v322, %v321
  %v337 = vpack.c.bf16 %v324, %v323
  %v338 = vpack.c.bf16 %v326, %v325
  %v339 = vpack.c.bf16 %v328, %v327
  %v340 = vpack.c.bf16 %v330, %v329
  %v341 = vpack.c.bf16 %v332, %v331
  %v342 = vpack.c.bf16 %v334, %v333
  %v343 = vld [vmem:[%s3] sm:$0xf]
  %v344 = vld [vmem:[%s3 + $0x4] sm:$0xf]
  %v345 = vld [vmem:[%s3 + $0x8] sm:$0xf]
  %v346 = vld [vmem:[%s3 + $0xc] sm:$0xf]
  %v347 = vld [vmem:[%s4] sm:$0x1]
  %v349 = vperm.slane %v347, 0
  %v355 = vunpack.c.l.b16 %v343
  %v356 = vunpack.c.l.b16 %v344
  %v357 = vunpack.c.l.b16 %v345
  %v358 = vunpack.c.l.b16 %v346
  %v359 = vpack.c.b16 %v356, %v355
  %v360 = vpack.c.b16 %v358, %v357
  %vm363 = vcmask 261120
  %v365 = vsel %vm363, %v335, 0
  %v368 = vsel %vm363, %v336, 0
  %v371 = vsel %vm363, %v337, 0
  %v374 = vsel %vm363, %v338, 0
  %v377 = vsel %vm363, %v339, 0
  %v380 = vsel %vm363, %v340, 0
  %v383 = vsel %vm363, %v341, 0
  %v386 = vsel %vm363, %v342, 0
  %388 = vmatpush.bf16.msra.mxu0 0
  %389 = vmatpush.bf16.msra.mxu0 0
  %390 = vmatpush.bf16.msra.mxu0 0
  %391 = vmatpush.bf16.msra.mxu0 0
  %392 = vmatpush.bf16.msra.mxu0 0
  %393 = vmatpush.bf16.msra.mxu0 0
  %394 = vmatpush.bf16.msra.mxu0 %v360
  %395 = vmatpush.bf16.msra.mxu0 %v359
  %396 = vmatmul.bf16.gmra.mxu0 %v365
  %v397 = vpop.f32.mrf.mxu0
  %v398 = vadd.f32 %v349, %v397
  %v399 = vpop.f32.mrf.mxu0
  %v400 = vadd.f32 %v349, %v399
  %401 = vmatmul.bf16.gmra.mxu0 %v368
  %v402 = vpop.f32.mrf.mxu0
  %v403 = vadd.f32 %v349, %v402
  %v404 = vpop.f32.mrf.mxu0
  %v405 = vadd.f32 %v349, %v404
  %406 = vmatmul.bf16.gmra.mxu0 %v371
  %v407 = vpop.f32.mrf.mxu0
  %v408 = vadd.f32 %v349, %v407
  %v409 = vpop.f32.mrf.mxu0
  %v410 = vadd.f32 %v349, %v409
  %411 = vmatmul.bf16.gmra.mxu0 %v374
  %v412 = vpop.f32.mrf.mxu0
  %v413 = vadd.f32 %v349, %v412
  %v414 = vpop.f32.mrf.mxu0
  %v415 = vadd.f32 %v349, %v414
  %416 = vmatmul.bf16.gmra.mxu0 %v377
  %v417 = vpop.f32.mrf.mxu0
  %v418 = vadd.f32 %v349, %v417
  %v419 = vpop.f32.mrf.mxu0
  %v420 = vadd.f32 %v349, %v419
  %421 = vmatmul.bf16.gmra.mxu0 %v380
  %v422 = vpop.f32.mrf.mxu0
  %v423 = vadd.f32 %v349, %v422
  %v424 = vpop.f32.mrf.mxu0
  %v425 = vadd.f32 %v349, %v424
  %426 = vmatmul.bf16.gmra.mxu0 %v383
  %v427 = vpop.f32.mrf.mxu0
  %v428 = vadd.f32 %v349, %v427
  %v429 = vpop.f32.mrf.mxu0
  %v430 = vadd.f32 %v349, %v429
  %431 = vmatmul.bf16.gmra.mxu0 %v386
  %v432 = vpop.f32.mrf.mxu0
  %v433 = vadd.f32 %v349, %v432
  %v434 = vpop.f32.mrf.mxu0
  %v435 = vadd.f32 %v349, %v434
  %436 = vdwg.mxu0
  %v437 = vmul.f32 %v398, %v398
  %v438 = vmul.f32 %v400, %v400
  %v439 = vmul.f32 %v403, %v403
  %v440 = vmul.f32 %v405, %v405
  %v441 = vmul.f32 %v408, %v408
  %v442 = vmul.f32 %v410, %v410
  %v443 = vmul.f32 %v413, %v413
  %v444 = vmul.f32 %v415, %v415
  %v445 = vmul.f32 %v418, %v418
  %v446 = vmul.f32 %v420, %v420
  %v447 = vmul.f32 %v423, %v423
  %v448 = vmul.f32 %v425, %v425
  %v449 = vmul.f32 %v428, %v428
  %v450 = vmul.f32 %v430, %v430
  %v451 = vmul.f32 %v433, %v433
  %v452 = vmul.f32 %v435, %v435
  %v453 = vmul.f32 %v398, %v437
  %v454 = vmul.f32 %v400, %v438
  %v455 = vmul.f32 %v403, %v439
  %v456 = vmul.f32 %v405, %v440
  %v457 = vmul.f32 %v408, %v441
  %v458 = vmul.f32 %v410, %v442
  %v459 = vmul.f32 %v413, %v443
  %v460 = vmul.f32 %v415, %v444
  %v461 = vmul.f32 %v418, %v445
  %v462 = vmul.f32 %v420, %v446
  %v463 = vmul.f32 %v423, %v447
  %v464 = vmul.f32 %v425, %v448
  %v465 = vmul.f32 %v428, %v449
  %v466 = vmul.f32 %v430, %v450
  %v467 = vmul.f32 %v433, %v451
  %v468 = vmul.f32 %v435, %v452
  %v469 = vmul.f32 %v453, 0.044715
  %v470 = vmul.f32 %v454, 0.044715
  %v471 = vmul.f32 %v455, 0.044715
  %v472 = vmul.f32 %v456, 0.044715
  %v473 = vmul.f32 %v457, 0.044715
  %v474 = vmul.f32 %v458, 0.044715
  %v475 = vmul.f32 %v459, 0.044715
  %v476 = vmul.f32 %v460, 0.044715
  %v477 = vmul.f32 %v461, 0.044715
  %v478 = vmul.f32 %v462, 0.044715
  %v479 = vmul.f32 %v463, 0.044715
  %v480 = vmul.f32 %v464, 0.044715
  %v481 = vmul.f32 %v465, 0.044715
  %v482 = vmul.f32 %v466, 0.044715
  %v483 = vmul.f32 %v467, 0.044715
  %v484 = vmul.f32 %v468, 0.044715
  %v485 = vadd.f32 %v398, %v469
  %v486 = vadd.f32 %v400, %v470
  %v487 = vadd.f32 %v403, %v471
  %v488 = vadd.f32 %v405, %v472
  %v489 = vadd.f32 %v408, %v473
  %v490 = vadd.f32 %v410, %v474
  %v491 = vadd.f32 %v413, %v475
  %v492 = vadd.f32 %v415, %v476
  %v493 = vadd.f32 %v418, %v477
  %v494 = vadd.f32 %v420, %v478
  %v495 = vadd.f32 %v423, %v479
  %v496 = vadd.f32 %v425, %v480
  %v497 = vadd.f32 %v428, %v481
  %v498 = vadd.f32 %v430, %v482
  %v499 = vadd.f32 %v433, %v483
  %v500 = vadd.f32 %v435, %v484
  %v501 = vmul.f32 %v485, 0.7978846
  %v502 = vmul.f32 %v486, 0.7978846
  %v503 = vmul.f32 %v487, 0.7978846
  %v504 = vmul.f32 %v488, 0.7978846
  %v505 = vmul.f32 %v489, 0.7978846
  %v506 = vmul.f32 %v490, 0.7978846
  %v507 = vmul.f32 %v491, 0.7978846
  %v508 = vmul.f32 %v492, 0.7978846
  %v509 = vmul.f32 %v493, 0.7978846
  %v510 = vmul.f32 %v494, 0.7978846
  %v511 = vmul.f32 %v495, 0.7978846
  %v512 = vmul.f32 %v496, 0.7978846
  %v513 = vmul.f32 %v497, 0.7978846
  %v514 = vmul.f32 %v498, 0.7978846
  %v515 = vmul.f32 %v499, 0.7978846
  %v516 = vmul.f32 %v500, 0.7978846
  %v517 = vtanh.pop %v501
  %v518 = vtanh.pop %v502
  %v519 = vtanh.pop %v503
  %v520 = vtanh.pop %v504
  %v521 = vtanh.pop %v505
  %v522 = vtanh.pop %v506
  %v523 = vtanh.pop %v507
  %v524 = vtanh.pop %v508
  %v525 = vtanh.pop %v509
  %v526 = vtanh.pop %v510
  %v527 = vtanh.pop %v511
  %v528 = vtanh.pop %v512
  %v529 = vtanh.pop %v513
  %v530 = vtanh.pop %v514
  %v531 = vtanh.pop %v515
  %v532 = vtanh.pop %v516
  %v533 = vadd.f32 %v517, 1.0
  %v534 = vadd.f32 %v518, 1.0
  %v535 = vadd.f32 %v519, 1.0
  %v536 = vadd.f32 %v520, 1.0
  %v537 = vadd.f32 %v521, 1.0
  %v538 = vadd.f32 %v522, 1.0
  %v539 = vadd.f32 %v523, 1.0
  %v540 = vadd.f32 %v524, 1.0
  %v541 = vadd.f32 %v525, 1.0
  %v542 = vadd.f32 %v526, 1.0
  %v543 = vadd.f32 %v527, 1.0
  %v544 = vadd.f32 %v528, 1.0
  %v545 = vadd.f32 %v529, 1.0
  %v546 = vadd.f32 %v530, 1.0
  %v547 = vadd.f32 %v531, 1.0
  %v548 = vadd.f32 %v532, 1.0
  %v549 = vmul.f32 %v533, 0.5
  %v550 = vmul.f32 %v534, 0.5
  %v551 = vmul.f32 %v535, 0.5
  %v552 = vmul.f32 %v536, 0.5
  %v553 = vmul.f32 %v537, 0.5
  %v554 = vmul.f32 %v538, 0.5
  %v555 = vmul.f32 %v539, 0.5
  %v556 = vmul.f32 %v540, 0.5
  %v557 = vmul.f32 %v541, 0.5
  %v558 = vmul.f32 %v542, 0.5
  %v559 = vmul.f32 %v543, 0.5
  %v560 = vmul.f32 %v544, 0.5
  %v561 = vmul.f32 %v545, 0.5
  %v562 = vmul.f32 %v546, 0.5
  %v563 = vmul.f32 %v547, 0.5
  %v564 = vmul.f32 %v548, 0.5
  %v565 = vmul.f32 %v398, %v549
  %v566 = vmul.f32 %v400, %v550
  %v567 = vmul.f32 %v403, %v551
  %v568 = vmul.f32 %v405, %v552
  %v569 = vmul.f32 %v408, %v553
  %v570 = vmul.f32 %v410, %v554
  %v571 = vmul.f32 %v413, %v555
  %v572 = vmul.f32 %v415, %v556
  %v573 = vmul.f32 %v418, %v557
  %v574 = vmul.f32 %v420, %v558
  %v575 = vmul.f32 %v423, %v559
  %v576 = vmul.f32 %v425, %v560
  %v577 = vmul.f32 %v428, %v561
  %v578 = vmul.f32 %v430, %v562
  %v579 = vmul.f32 %v433, %v563
  %v580 = vmul.f32 %v435, %v564
  %v581 = vpack.c.bf16 %v566, %v565
  %v582 = vpack.c.bf16 %v568, %v567
  %v583 = vpack.c.bf16 %v570, %v569
  %v584 = vpack.c.bf16 %v572, %v571
  %v585 = vpack.c.bf16 %v574, %v573
  %v586 = vpack.c.bf16 %v576, %v575
  %v587 = vpack.c.bf16 %v578, %v577
  %v588 = vpack.c.bf16 %v580, %v579
  %v589 = vld [vmem:[%s5] sm:$0xf]
  %v590 = vld [vmem:[%s5 + $0x4] sm:$0xf]
  %v591 = vld [vmem:[%s5 + $0x8] sm:$0xf]
  %v592 = vld [vmem:[%s5 + $0xc] sm:$0xf]
  %v593 = vld [vmem:[%s5 + $0x10] sm:$0xf]
  %v594 = vld [vmem:[%s5 + $0x14] sm:$0xf]
  %v595 = vld [vmem:[%s5 + $0x18] sm:$0xf]
  %v596 = vld [vmem:[%s5 + $0x1c] sm:$0xf]
  %v597 = vld [vmem:[%s6] sm:$0x1]
  %v599 = vperm.slane %v597, 0
  %v609 = vunpack.c.l.b16 %v589
  %v610 = vunpack.c.l.b16 %v590
  %v611 = vunpack.c.l.b16 %v591
  %v612 = vunpack.c.l.b16 %v592
  %v613 = vunpack.c.l.b16 %v593
  %v614 = vunpack.c.l.b16 %v594
  %v615 = vunpack.c.l.b16 %v595
  %v616 = vunpack.c.l.b16 %v596
  %v617 = vpack.c.b16 %v610, %v609
  %v618 = vpack.c.b16 %v612, %v611
  %v619 = vpack.c.b16 %v614, %v613
  %v620 = vpack.c.b16 %v616, %v615
  %vm625 = vcmask 523264
  %v627 = vsel %vm625, %v581, 0
  %v630 = vsel %vm625, %v582, 0
  %v633 = vsel %vm625, %v583, 0
  %v636 = vsel %vm625, %v584, 0
  %v639 = vsel %vm625, %v585, 0
  %v642 = vsel %vm625, %v586, 0
  %v645 = vsel %vm625, %v587, 0
  %v648 = vsel %vm625, %v588, 0
  %650 = vmatpush.bf16.msra.mxu0 0
  %651 = vmatpush.bf16.msra.mxu0 0
  %652 = vmatpush.bf16.msra.mxu0 0
  %653 = vmatpush.bf16.msra.mxu0 0
  %654 = vmatpush.bf16.msra.mxu0 %v620
  %655 = vmatpush.bf16.msra.mxu0 %v619
  %656 = vmatpush.bf16.msra.mxu0 %v618
  %657 = vmatpush.bf16.msra.mxu0 %v617
  %658 = vmatmul.bf16.gmra.mxu0 %v627
  %v659 = vpop.f32.mrf.mxu0
  %v660 = vadd.f32 %v599, %v659
  %v661 = vpop.f32.mrf.mxu0
  %v662 = vadd.f32 %v599, %v661
  %663 = vmatmul.bf16.gmra.mxu0 %v630
  %v664 = vpop.f32.mrf.mxu0
  %v665 = vadd.f32 %v599, %v664
  %v666 = vpop.f32.mrf.mxu0
  %v667 = vadd.f32 %v599, %v666
  %668 = vmatmul.bf16.gmra.mxu0 %v633
  %v669 = vpop.f32.mrf.mxu0
  %v670 = vadd.f32 %v599, %v669
  %v671 = vpop.f32.mrf.mxu0
  %v672 = vadd.f32 %v599, %v671
  %673 = vmatmul.bf16.gmra.mxu0 %v636
  %v674 = vpop.f32.mrf.mxu0
  %v675 = vadd.f32 %v599, %v674
  %v676 = vpop.f32.mrf.mxu0
  %v677 = vadd.f32 %v599, %v676
  %678 = vmatmul.bf16.gmra.mxu0 %v639
  %v679 = vpop.f32.mrf.mxu0
  %v680 = vadd.f32 %v599, %v679
  %v681 = vpop.f32.mrf.mxu0
  %v682 = vadd.f32 %v599, %v681
  %683 = vmatmul.bf16.gmra.mxu0 %v642
  %v684 = vpop.f32.mrf.mxu0
  %v685 = vadd.f32 %v599, %v684
  %v686 = vpop.f32.mrf.mxu0
  %v687 = vadd.f32 %v599, %v686
  %688 = vmatmul.bf16.gmra.mxu0 %v645
  %v689 = vpop.f32.mrf.mxu0
  %v690 = vadd.f32 %v599, %v689
  %v691 = vpop.f32.mrf.mxu0
  %v692 = vadd.f32 %v599, %v691
  %693 = vmatmul.bf16.gmra.mxu0 %v648
  %v694 = vpop.f32.mrf.mxu0
  %v695 = vadd.f32 %v599, %v694
  %v696 = vpop.f32.mrf.mxu0
  %v697 = vadd.f32 %v599, %v696
  %698 = vdwg.mxu0
  %v699 = vadd.f32 %v319, %v660
  %v700 = vadd.f32 %v320, %v662
  %v701 = vadd.f32 %v321, %v665
  %v702 = vadd.f32 %v322, %v667
  %v703 = vadd.f32 %v323, %v670
  %v704 = vadd.f32 %v324, %v672
  %v705 = vadd.f32 %v325, %v675
  %v706 = vadd.f32 %v326, %v677
  %v707 = vadd.f32 %v327, %v680
  %v708 = vadd.f32 %v328, %v682
  %v709 = vadd.f32 %v329, %v685
  %v710 = vadd.f32 %v330, %v687
  %v711 = vadd.f32 %v331, %v690
  %v712 = vadd.f32 %v332, %v692
  %v713 = vadd.f32 %v333, %v695
  %v714 = vadd.f32 %v334, %v697
  %v715 = vpack.c.bf16 %v700, %v699
  %v716 = vpack.c.bf16 %v702, %v701
  %v717 = vpack.c.bf16 %v704, %v703
  %v718 = vpack.c.bf16 %v706, %v705
  %v719 = vpack.c.bf16 %v708, %v707
  %v720 = vpack.c.bf16 %v710, %v709
  %v721 = vpack.c.bf16 %v712, %v711
  %v722 = vpack.c.bf16 %v714, %v713
  %v723 = vld [vmem:[%s7] sm:$0xf]
  %v724 = vld [vmem:[%s7 + $0x4] sm:$0xf]
  %v725 = vld [vmem:[%s7 + $0x8] sm:$0xf]
  %v726 = vld [vmem:[%s7 + $0xc] sm:$0xf]
  %v727 = vld [vmem:[%s8] sm:$0x1]
  %v729 = vperm.slane %v727, 0
  %v735 = vunpack.c.l.b16 %v723
  %v736 = vunpack.c.l.b16 %v724
  %v737 = vunpack.c.l.b16 %v725
  %v738 = vunpack.c.l.b16 %v726
  %v739 = vpack.c.b16 %v736, %v735
  %v740 = vpack.c.b16 %v738, %v737
  %v744 = vsel %vm363, %v715, 0
  %v747 = vsel %vm363, %v716, 0
  %v750 = vsel %vm363, %v717, 0
  %v753 = vsel %vm363, %v718, 0
  %v756 = vsel %vm363, %v719, 0
  %v759 = vsel %vm363, %v720, 0
  %v762 = vsel %vm363, %v721, 0
  %v765 = vsel %vm363, %v722, 0
  %767 = vmatpush.bf16.msra.mxu0 0
  %768 = vmatpush.bf16.msra.mxu0 0
  %769 = vmatpush.bf16.msra.mxu0 0
  %770 = vmatpush.bf16.msra.mxu0 0
  %771 = vmatpush.bf16.msra.mxu0 0
  %772 = vmatpush.bf16.msra.mxu0 0
  %773 = vmatpush.bf16.msra.mxu0 %v740
  %774 = vmatpush.bf16.msra.mxu0 %v739
  %775 = vmatmul.bf16.gmra.mxu0 %v744
  %v776 = vpop.f32.mrf.mxu0
  %v777 = vadd.f32 %v729, %v776
  %v778 = vpop.f32.mrf.mxu0
  %v779 = vadd.f32 %v729, %v778
  %780 = vmatmul.bf16.gmra.mxu0 %v747
  %v781 = vpop.f32.mrf.mxu0
  %v782 = vadd.f32 %v729, %v781
  %v783 = vpop.f32.mrf.mxu0
  %v784 = vadd.f32 %v729, %v783
  %785 = vmatmul.bf16.gmra.mxu0 %v750
  %v786 = vpop.f32.mrf.mxu0
  %v787 = vadd.f32 %v729, %v786
  %v788 = vpop.f32.mrf.mxu0
  %v789 = vadd.f32 %v729, %v788
  %790 = vmatmul.bf16.gmra.mxu0 %v753
  %v791 = vpop.f32.mrf.mxu0
  %v792 = vadd.f32 %v729, %v791
  %v793 = vpop.f32.mrf.mxu0
  %v794 = vadd.f32 %v729, %v793
  %795 = vmatmul.bf16.gmra.mxu0 %v756
  %v796 = vpop.f32.mrf.mxu0
  %v797 = vadd.f32 %v729, %v796
  %v798 = vpop.f32.mrf.mxu0
  %v799 = vadd.f32 %v729, %v798
  %800 = vmatmul.bf16.gmra.mxu0 %v759
  %v801 = vpop.f32.mrf.mxu0
  %v802 = vadd.f32 %v729, %v801
  %v803 = vpop.f32.mrf.mxu0
  %v804 = vadd.f32 %v729, %v803
  %805 = vmatmul.bf16.gmra.mxu0 %v762
  %v806 = vpop.f32.mrf.mxu0
  %v807 = vadd.f32 %v729, %v806
  %v808 = vpop.f32.mrf.mxu0
  %v809 = vadd.f32 %v729, %v808
  %810 = vmatmul.bf16.gmra.mxu0 %v765
  %v811 = vpop.f32.mrf.mxu0
  %v812 = vadd.f32 %v729, %v811
  %v813 = vpop.f32.mrf.mxu0
  %v814 = vadd.f32 %v729, %v813
  %815 = vdwg.mxu0
  %vm816 = vcmask 31744
  %817 = vst.msk [vmem:[%s9] sm:$0xff] %vm816, %v777
  %818 = vst.msk [vmem:[%s9 + $0x8] sm:$0xff] %vm816, %v779
  %819 = vst.msk [vmem:[%s9 + $0x10] sm:$0xff] %vm816, %v782
  %820 = vst.msk [vmem:[%s9 + $0x18] sm:$0xff] %vm816, %v784
  %821 = vst.msk [vmem:[%s9 + $0x20] sm:$0xff] %vm816, %v787
  %822 = vst.msk [vmem:[%s9 + $0x28] sm:$0xff] %vm816, %v789
  %823 = vst.msk [vmem:[%s9 + $0x30] sm:$0xff] %vm816, %v792
  %824 = vst.msk [vmem:[%s9 + $0x38] sm:$0xff] %vm816, %v794
  %825 = vst.msk [vmem:[%s9 + $0x40] sm:$0xff] %vm816, %v797
  %826 = vst.msk [vmem:[%s9 + $0x48] sm:$0xff] %vm816, %v799
  %827 = vst.msk [vmem:[%s9 + $0x50] sm:$0xff] %vm816, %v802
  %828 = vst.msk [vmem:[%s9 + $0x58] sm:$0xff] %vm816, %v804
  %829 = vst.msk [vmem:[%s9 + $0x60] sm:$0xff] %vm816, %v807
  %830 = vst.msk [vmem:[%s9 + $0x68] sm:$0xff] %vm816, %v809
  %831 = vst.msk [vmem:[%s9 + $0x70] sm:$0xff] %vm816, %v812
  %832 = vst.msk [vmem:[%s9 + $0x78] sm:$0xff] %vm816, %v814
  // Predicated region
  $region38: #{stable_diffusion_with_hybrid_encoder.2} parent=0 // pred_check
    _
  $region39: #{stable_diffusion_with_hybrid_encoder.2} parent=0 // pred_check_branch
    %834 = sbr.rel (0) target = $region41
  $region40: #{stable_diffusion_with_hybrid_encoder.2} parent=0 // pred_region
    _
  $region41: #{stable_diffusion_with_hybrid_encoder.2} parent=0 // pred_fallthru
    _
  // Predicated region
  $region42: #{stable_diffusion_with_hybrid_encoder.2} parent=0 // pred_check
    _
  $region43: #{stable_diffusion_with_hybrid_encoder.2} parent=0 // pred_check_branch
    %836 = sbr.rel (0) target = $region45
  $region44: #{stable_diffusion_with_hybrid_encoder.2} parent=0 // pred_region
    _
  $region45: #{stable_diffusion_with_hybrid_encoder.2} parent=0 // pred_fallthru
    _

// kernel: stable_diffusion_with_hybrid_encoder.3
$region0: #{stable_diffusion_with_hybrid_encoder.3}
  #allocation0 [shape = 'u32[]', space=smem, size = 0x4, offset = 0x4, fixed_abs, tag = 'smem constant byte address 0x4 - core index']
  #allocation1 [shape = 'u32[72,128]{1,0:T(1,128)}', space=vmem, size = 0x9000, scoped, tag = 'internal scratch']
  %s0 = inlined_call_operand.vmem [shape: bf16[2,1,32], index: 0, kind: input, shape index: {}]
  %s1 = inlined_call_operand.vmem [shape: bf16[2,10,32], index: 1, kind: input, shape index: {}]
  %s2 = inlined_call_operand.vmem [shape: bf16[32,32], index: 2, kind: input, shape index: {}]
  %s3 = inlined_call_operand.vmem [shape: f32[1,32], index: 3, kind: input, shape index: {}]
  %s4 = inlined_call_operand.vmem [shape: bf16[32,64], index: 4, kind: input, shape index: {}]
  %s5 = inlined_call_operand.vmem [shape: f32[1,64], index: 5, kind: input, shape index: {}]
  %s6 = inlined_call_operand.vmem [shape: bf16[3,32,256], index: 6, kind: input, shape index: {}]
  %s7 = inlined_call_operand.vmem [shape: f32[1,256], index: 7, kind: input, shape index: {}]
  %s8 = inlined_call_operand.vmem [shape: bf16[3,256,32], index: 8, kind: input, shape index: {}]
  %s9 = inlined_call_operand.vmem [shape: f32[1,32], index: 9, kind: input, shape index: {}]
  %s10 = inlined_call_operand.vmem [shape: f32[2,8,32], index: 10, kind: output, shape index: {}]
  %s11 = sld [smem:[#allocation0]]
  $region73: #{stable_diffusion_with_hybrid_encoder.3} parent=0
    _
  %s13 = ssub.s32 1, %s11
  %s14 = scalar_select 0, %s13, %s11
  loop: start=0, step=1, limit=4
  $region2: #{stable_diffusion_with_hybrid_encoder.3} parent=0 // loop_pre_header
    _
  $region3: #{stable_diffusion_with_hybrid_encoder.3} parent=0 // loop_header
    %s16 = sphi 0, %s20
    %p17 = scmp.ge.s32.totalorder %s16, 4
    %s26 = sphi 0, %s28
    %s29 = sphi 0, %s26
    %s30 = sphi 0, %s29
    %s46 = sphi 0, %s30
    %s52 = sphi 0, %s54
    %s55 = sphi 0, %s52
    %s56 = sphi 0, %s55
    %s72 = sphi 0, %s56
    %s76 = sphi 0, %s76
    %s78 = sphi 0, %s76
    %s79 = sphi 0, %s78
    %s93 = sphi 0, %s79
    %s97 = sphi 0, %s97
    %s99 = sphi 0, %s97
    %s100 = sphi 0, %s99
    %s114 = sphi 0, %s100
    %s118 = sphi 0, %s118
    %s120 = sphi 0, %s118
    %s121 = sphi 0, %s120
    %s135 = sphi 0, %s121
    %s139 = sphi 0, %s139
    %s141 = sphi 0, %s139
    %s142 = sphi 0, %s141
    %s156 = sphi 0, %s142
    %s160 = sphi 0, %s160
    %s162 = sphi 0, %s160
    %s163 = sphi 0, %s162
    %s177 = sphi 0, %s163
    %s181 = sphi 0, %s181
    %s183 = sphi 0, %s181
    %s184 = sphi 0, %s183
    %s198 = sphi 0, %s184
    %s202 = sphi 0, %s202
    %s204 = sphi 0, %s202
    %s205 = sphi 0, %s204
    %s219 = sphi 0, %s205
    %s223 = sphi 0, %s223
    %s225 = sphi 0, %s223
    %s226 = sphi 0, %s225
    %s240 = sphi 0, %s226
    %s246 = sphi 0, %s248
    %s249 = sphi 0, %s246
    %s250 = sphi 0, %s249
    %s266 = sphi 0, %s250
  $region4: #{stable_diffusion_with_hybrid_encoder.3} parent=0 // loop_header_branch
    %19 = sbr.rel (%p17) target = $region8
  $region5: #{stable_diffusion_with_hybrid_encoder.3} parent=0 // loop_body
    %s21 = ssub.s32 %s16, 1
    %s22 = ssub.s32 %s16, 2
    %s23 = sadd.s32 %s16, 1
    %s24 = ssub.s32 %s16, %s23
    %p25 = scmp.eq.s32.totalorder %s24, 0
    %s27 = sadd.s32 %s26, 1
    %s28 = scalar_select %p25, %s26, %s27
    %p31 = pneg %p25
    %p32 = scmp.eq.s32.totalorder %s16, 1
    %p33 = por %p31, %p32
    %p34 = scmp.ne.s32.totalorder %s26, %s29
    %p35 = scmp.eq.s32.totalorder %s16, 0
    %p36 = por %p34, %p35
    %p37 = scmp.ne.s32.totalorder %s26, %s29
    %p38 = scmp.eq.s32.totalorder %s21, 1
    %p39 = por %p37, %p38
    %p40 = scmp.ne.s32.totalorder %s29, %s30
    %p41 = scmp.eq.s32.totalorder %s21, 0
    %p42 = por %p40, %p41
    %p43 = scmp.ne.s32.totalorder %s29, %s30
    %p44 = scmp.eq.s32.totalorder %s22, 1
    %p45 = por %p43, %p44
    %p47 = scmp.ne.s32.totalorder %s30, %s46
    %p48 = scmp.eq.s32.totalorder %s22, 0
    %p49 = por %p47, %p48
    %s50 = ssub.s32 %s16, %s23
    %p51 = scmp.eq.s32.totalorder %s50, 0
    %s53 = sadd.s32 %s52, 1
    %s54 = scalar_select %p51, %s52, %s53
    %p57 = pneg %p51
    %p58 = scmp.eq.s32.totalorder %s16, 1
    %p59 = por %p57, %p58
    %p60 = scmp.ne.s32.totalorder %s52, %s55
    %p61 = scmp.eq.s32.totalorder %s16, 0
    %p62 = por %p60, %p61
    %p63 = scmp.ne.s32.totalorder %s52, %s55
    %p64 = scmp.eq.s32.totalorder %s21, 1
    %p65 = por %p63, %p64
    %p66 = scmp.ne.s32.totalorder %s55, %s56
    %p67 = scmp.eq.s32.totalorder %s21, 0
    %p68 = por %p66, %p67
    %p69 = scmp.ne.s32.totalorder %s55, %s56
    %p70 = scmp.eq.s32.totalorder %s22, 1
    %p71 = por %p69, %p70
    %p73 = scmp.ne.s32.totalorder %s56, %s72
    %p74 = scmp.eq.s32.totalorder %s22, 0
    %p75 = por %p73, %p74
    %s77 = sadd.s32 %s76, 1
    %p80 = scmp.eq.s32.totalorder %s16, 1
    %p81 = scmp.ne.s32.totalorder %s76, %s78
    %p82 = scmp.eq.s32.totalorder %s16, 0
    %p83 = por %p81, %p82
    %p84 = scmp.ne.s32.totalorder %s76, %s78
    %p85 = scmp.eq.s32.totalorder %s21, 1
    %p86 = por %p84, %p85
    %p87 = scmp.ne.s32.totalorder %s78, %s79
    %p88 = scmp.eq.s32.totalorder %s21, 0
    %p89 = por %p87, %p88
    %p90 = scmp.ne.s32.totalorder %s78, %s79
    %p91 = scmp.eq.s32.totalorder %s22, 1
    %p92 = por %p90, %p91
    %p94 = scmp.ne.s32.totalorder %s79, %s93
    %p95 = scmp.eq.s32.totalorder %s22, 0
    %p96 = por %p94, %p95
    %s98 = sadd.s32 %s97, 1
    %p101 = scmp.eq.s32.totalorder %s16, 1
    %p102 = scmp.ne.s32.totalorder %s97, %s99
    %p103 = scmp.eq.s32.totalorder %s16, 0
    %p104 = por %p102, %p103
    %p105 = scmp.ne.s32.totalorder %s97, %s99
    %p106 = scmp.eq.s32.totalorder %s21, 1
    %p107 = por %p105, %p106
    %p108 = scmp.ne.s32.totalorder %s99, %s100
    %p109 = scmp.eq.s32.totalorder %s21, 0
    %p110 = por %p108, %p109
    %p111 = scmp.ne.s32.totalorder %s99, %s100
    %p112 = scmp.eq.s32.totalorder %s22, 1
    %p113 = por %p111, %p112
    %p115 = scmp.ne.s32.totalorder %s100, %s114
    %p116 = scmp.eq.s32.totalorder %s22, 0
    %p117 = por %p115, %p116
    %s119 = sadd.s32 %s118, 1
    %p122 = scmp.eq.s32.totalorder %s16, 1
    %p123 = scmp.ne.s32.totalorder %s118, %s120
    %p124 = scmp.eq.s32.totalorder %s16, 0
    %p125 = por %p123, %p124
    %p126 = scmp.ne.s32.totalorder %s118, %s120
    %p127 = scmp.eq.s32.totalorder %s21, 1
    %p128 = por %p126, %p127
    %p129 = scmp.ne.s32.totalorder %s120, %s121
    %p130 = scmp.eq.s32.totalorder %s21, 0
    %p131 = por %p129, %p130
    %p132 = scmp.ne.s32.totalorder %s120, %s121
    %p133 = scmp.eq.s32.totalorder %s22, 1
    %p134 = por %p132, %p133
    %p136 = scmp.ne.s32.totalorder %s121, %s135
    %p137 = scmp.eq.s32.totalorder %s22, 0
    %p138 = por %p136, %p137
    %s140 = sadd.s32 %s139, 1
    %p143 = scmp.eq.s32.totalorder %s16, 1
    %p144 = scmp.ne.s32.totalorder %s139, %s141
    %p145 = scmp.eq.s32.totalorder %s16, 0
    %p146 = por %p144, %p145
    %p147 = scmp.ne.s32.totalorder %s139, %s141
    %p148 = scmp.eq.s32.totalorder %s21, 1
    %p149 = por %p147, %p148
    %p150 = scmp.ne.s32.totalorder %s141, %s142
    %p151 = scmp.eq.s32.totalorder %s21, 0
    %p152 = por %p150, %p151
    %p153 = scmp.ne.s32.totalorder %s141, %s142
    %p154 = scmp.eq.s32.totalorder %s22, 1
    %p155 = por %p153, %p154
    %p157 = scmp.ne.s32.totalorder %s142, %s156
    %p158 = scmp.eq.s32.totalorder %s22, 0
    %p159 = por %p157, %p158
    %s161 = sadd.s32 %s160, 1
    %p164 = scmp.eq.s32.totalorder %s16, 1
    %p165 = scmp.ne.s32.totalorder %s160, %s162
    %p166 = scmp.eq.s32.totalorder %s16, 0
    %p167 = por %p165, %p166
    %p168 = scmp.ne.s32.totalorder %s160, %s162
    %p169 = scmp.eq.s32.totalorder %s21, 1
    %p170 = por %p168, %p169
    %p171 = scmp.ne.s32.totalorder %s162, %s163
    %p172 = scmp.eq.s32.totalorder %s21, 0
    %p173 = por %p171, %p172
    %p174 = scmp.ne.s32.totalorder %s162, %s163
    %p175 = scmp.eq.s32.totalorder %s22, 1
    %p176 = por %p174, %p175
    %p178 = scmp.ne.s32.totalorder %s163, %s177
    %p179 = scmp.eq.s32.totalorder %s22, 0
    %p180 = por %p178, %p179
    %s182 = sadd.s32 %s181, 1
    %p185 = scmp.eq.s32.totalorder %s16, 1
    %p186 = scmp.ne.s32.totalorder %s181, %s183
    %p187 = scmp.eq.s32.totalorder %s16, 0
    %p188 = por %p186, %p187
    %p189 = scmp.ne.s32.totalorder %s181, %s183
    %p190 = scmp.eq.s32.totalorder %s21, 1
    %p191 = por %p189, %p190
    %p192 = scmp.ne.s32.totalorder %s183, %s184
    %p193 = scmp.eq.s32.totalorder %s21, 0
    %p194 = por %p192, %p193
    %p195 = scmp.ne.s32.totalorder %s183, %s184
    %p196 = scmp.eq.s32.totalorder %s22, 1
    %p197 = por %p195, %p196
    %p199 = scmp.ne.s32.totalorder %s184, %s198
    %p200 = scmp.eq.s32.totalorder %s22, 0
    %p201 = por %p199, %p200
    %s203 = sadd.s32 %s202, 1
    %p206 = scmp.eq.s32.totalorder %s16, 1
    %p207 = scmp.ne.s32.totalorder %s202, %s204
    %p208 = scmp.eq.s32.totalorder %s16, 0
    %p209 = por %p207, %p208
    %p210 = scmp.ne.s32.totalorder %s202, %s204
    %p211 = scmp.eq.s32.totalorder %s21, 1
    %p212 = por %p210, %p211
    %p213 = scmp.ne.s32.totalorder %s204, %s205
    %p214 = scmp.eq.s32.totalorder %s21, 0
    %p215 = por %p213, %p214
    %p216 = scmp.ne.s32.totalorder %s204, %s205
    %p217 = scmp.eq.s32.totalorder %s22, 1
    %p218 = por %p216, %p217
    %p220 = scmp.ne.s32.totalorder %s205, %s219
    %p221 = scmp.eq.s32.totalorder %s22, 0
    %p222 = por %p220, %p221
    %s224 = sadd.s32 %s223, 1
    %p227 = scmp.eq.s32.totalorder %s16, 1
    %p228 = scmp.ne.s32.totalorder %s223, %s225
    %p229 = scmp.eq.s32.totalorder %s16, 0
    %p230 = por %p228, %p229
    %p231 = scmp.ne.s32.totalorder %s223, %s225
    %p232 = scmp.eq.s32.totalorder %s21, 1
    %p233 = por %p231, %p232
    %p234 = scmp.ne.s32.totalorder %s225, %s226
    %p235 = scmp.eq.s32.totalorder %s21, 0
    %p236 = por %p234, %p235
    %p237 = scmp.ne.s32.totalorder %s225, %s226
    %p238 = scmp.eq.s32.totalorder %s22, 1
    %p239 = por %p237, %p238
    %p241 = scmp.ne.s32.totalorder %s226, %s240
    %p242 = scmp.eq.s32.totalorder %s22, 0
    %p243 = por %p241, %p242
    %s244 = ssub.s32 %s16, %s23
    %p245 = scmp.eq.s32.totalorder %s244, 0
    %s247 = sadd.s32 %s246, 1
    %s248 = scalar_select %p245, %s246, %s247
    %p251 = pneg %p245
    %p252 = scmp.eq.s32.totalorder %s16, 1
    %p253 = por %p251, %p252
    %p254 = scmp.ne.s32.totalorder %s246, %s249
    %p255 = scmp.eq.s32.totalorder %s16, 0
    %p256 = por %p254, %p255
    %p257 = scmp.ne.s32.totalorder %s246, %s249
    %p258 = scmp.eq.s32.totalorder %s21, 1
    %p259 = por %p257, %p258
    %p260 = scmp.ne.s32.totalorder %s249, %s250
    %p261 = scmp.eq.s32.totalorder %s21, 0
    %p262 = por %p260, %p261
    %p263 = scmp.ne.s32.totalorder %s249, %s250
    %p264 = scmp.eq.s32.totalorder %s22, 1
    %p265 = por %p263, %p264
    %p267 = scmp.ne.s32.totalorder %s250, %s266
    %p268 = scmp.eq.s32.totalorder %s22, 0
    %p269 = por %p267, %p268
    %p270 = scmp.le.s32.totalorder 1, %s16
    %p271 = scmp.lt.s32.totalorder %s16, 3
    %p272 = pnand %p270, %p271
    %p273 = pneg %p272
    // Predicated region
    $region9: #{stable_diffusion_with_hybrid_encoder.3} parent=5 // pred_check
      _
    $region10: #{stable_diffusion_with_hybrid_encoder.3} parent=5 // pred_check_branch
      %275 = sbr.rel (%p272) target = $region12
    $region11: #{stable_diffusion_with_hybrid_encoder.3} parent=5 // pred_region
      %s276 = ssub.s32 %s16, 1
      // Predicated region
      $region13: #{stable_diffusion_with_hybrid_encoder.3} parent=11 // pred_check
        %p277 = pneg %p89
      $region14: #{stable_diffusion_with_hybrid_encoder.3} parent=11 // pred_check_branch
        %279 = sbr.rel (%p277) target = $region16
      $region15: #{stable_diffusion_with_hybrid_encoder.3} parent=11 // pred_region
        _
      $region16: #{stable_diffusion_with_hybrid_encoder.3} parent=11 // pred_fallthru
        _
      // Predicated region
      $region17: #{stable_diffusion_with_hybrid_encoder.3} parent=11 // pred_check
        %p280 = pneg %p110
      $region18: #{stable_diffusion_with_hybrid_encoder.3} parent=11 // pred_check_branch
        %282 = sbr.rel (%p280) target = $region20
      $region19: #{stable_diffusion_with_hybrid_encoder.3} parent=11 // pred_region
        _
      $region20: #{stable_diffusion_with_hybrid_encoder.3} parent=11 // pred_fallthru
        _
      // Predicated region
      $region21: #{stable_diffusion_with_hybrid_encoder.3} parent=11 // pred_check
        %p283 = pneg %p131
      $region22: #{stable_diffusion_with_hybrid_encoder.3} parent=11 // pred_check_branch
        %285 = sbr.rel (%p283) target = $region24
      $region23: #{stable_diffusion_with_hybrid_encoder.3} parent=11 // pred_region
        _
      $region24: #{stable_diffusion_with_hybrid_encoder.3} parent=11 // pred_fallthru
        _
      // Predicated region
      $region25: #{stable_diffusion_with_hybrid_encoder.3} parent=11 // pred_check
        %p286 = pneg %p152
      $region26: #{stable_diffusion_with_hybrid_encoder.3} parent=11 // pred_check_branch
        %288 = sbr.rel (%p286) target = $region28
      $region27: #{stable_diffusion_with_hybrid_encoder.3} parent=11 // pred_region
        _
      $region28: #{stable_diffusion_with_hybrid_encoder.3} parent=11 // pred_fallthru
        _
      // Predicated region
      $region29: #{stable_diffusion_with_hybrid_encoder.3} parent=11 // pred_check
        %p289 = pneg %p173
      $region30: #{stable_diffusion_with_hybrid_encoder.3} parent=11 // pred_check_branch
        %291 = sbr.rel (%p289) target = $region32
      $region31: #{stable_diffusion_with_hybrid_encoder.3} parent=11 // pred_region
        _
      $region32: #{stable_diffusion_with_hybrid_encoder.3} parent=11 // pred_fallthru
        _
      // Predicated region
      $region33: #{stable_diffusion_with_hybrid_encoder.3} parent=11 // pred_check
        %p292 = pneg %p194
      $region34: #{stable_diffusion_with_hybrid_encoder.3} parent=11 // pred_check_branch
        %294 = sbr.rel (%p292) target = $region36
      $region35: #{stable_diffusion_with_hybrid_encoder.3} parent=11 // pred_region
        _
      $region36: #{stable_diffusion_with_hybrid_encoder.3} parent=11 // pred_fallthru
        _
      // Predicated region
      $region37: #{stable_diffusion_with_hybrid_encoder.3} parent=11 // pred_check
        %p295 = pneg %p215
      $region38: #{stable_diffusion_with_hybrid_encoder.3} parent=11 // pred_check_branch
        %297 = sbr.rel (%p295) target = $region40
      $region39: #{stable_diffusion_with_hybrid_encoder.3} parent=11 // pred_region
        _
      $region40: #{stable_diffusion_with_hybrid_encoder.3} parent=11 // pred_fallthru
        _
      // Predicated region
      $region41: #{stable_diffusion_with_hybrid_encoder.3} parent=11 // pred_check
        %p298 = pneg %p236
      $region42: #{stable_diffusion_with_hybrid_encoder.3} parent=11 // pred_check_branch
        %300 = sbr.rel (%p298) target = $region44
      $region43: #{stable_diffusion_with_hybrid_encoder.3} parent=11 // pred_region
        _
      $region44: #{stable_diffusion_with_hybrid_encoder.3} parent=11 // pred_fallthru
        _
    $region12: #{stable_diffusion_with_hybrid_encoder.3} parent=5 // pred_fallthru
      _
    %p301 = scmp.lt.s32.totalorder %s16, 2
    // Predicated region
    $region45: #{stable_diffusion_with_hybrid_encoder.3} parent=5 // pred_check
      %p302 = pneg %p301
    $region46: #{stable_diffusion_with_hybrid_encoder.3} parent=5 // pred_check_branch
      %304 = sbr.rel (%p302) target = $region48
    $region47: #{stable_diffusion_with_hybrid_encoder.3} parent=5 // pred_region
      // Predicated region
      $region49: #{stable_diffusion_with_hybrid_encoder.3} parent=47 // pred_check
        %p305 = pneg %p36
      $region50: #{stable_diffusion_with_hybrid_encoder.3} parent=47 // pred_check_branch
        %307 = sbr.rel (%p305) target = $region52
      $region51: #{stable_diffusion_with_hybrid_encoder.3} parent=47 // pred_region
        %p308 = scmp.lt.s32.totalorder %s16, 1
        %s309 = scalar_select %p308, %s16, 1
        %s310 = scalar_lea.vmem %s0, %s309
      $region52: #{stable_diffusion_with_hybrid_encoder.3} parent=47 // pred_fallthru
        _
      // Predicated region
      $region53: #{stable_diffusion_with_hybrid_encoder.3} parent=47 // pred_check
        %p311 = pneg %p62
      $region54: #{stable_diffusion_with_hybrid_encoder.3} parent=47 // pred_check_branch
        %313 = sbr.rel (%p311) target = $region56
      $region55: #{stable_diffusion_with_hybrid_encoder.3} parent=47 // pred_region
        %p314 = scmp.lt.s32.totalorder %s16, 1
        %s315 = scalar_select %p314, %s16, 1
        %s316 = smul.addr %s315, 2
        %s317 = smul.addr %s316, 4
        %s318 = scalar_lea.vmem %s1, %s317
      $region56: #{stable_diffusion_with_hybrid_encoder.3} parent=47 // pred_fallthru
        _
    $region48: #{stable_diffusion_with_hybrid_encoder.3} parent=5 // pred_fallthru
      _
    %p319 = scmp.le.s32.totalorder 1, %s16
    %p320 = scmp.lt.s32.totalorder %s16, 3
    %p321 = pnand %p319, %p320
    %p322 = pneg %p321
    // Predicated region
    $region57: #{stable_diffusion_with_hybrid_encoder.3} parent=5 // pred_check
      _
    $region58: #{stable_diffusion_with_hybrid_encoder.3} parent=5 // pred_check_branch
      %324 = sbr.rel (%p321) target = $region60
    $region59: #{stable_diffusion_with_hybrid_encoder.3} parent=5 // pred_region
      %s325 = ssub.s32 %s16, 1
      %p326 = scmp.lt.s32.totalorder %s21, 1
      %s327 = scalar_select %p326, %s21, 1
      %s328 = scalar_lea.vmem %s0, %s327
      %p329 = pneg %p42
      %p330 = pneg %p39
      %p331 = scmp.lt.s32.totalorder %s21, 1
      %s332 = scalar_select %p331, %s21, 1
      %s333 = smul.addr %s332, 2
      %s334 = smul.addr %s333, 4
      %s335 = scalar_lea.vmem %s1, %s334
      %p336 = pneg %p68
      %p337 = pneg %p65
      %p338 = pneg %p89
      %p339 = pneg %p86
      %p340 = pneg %p110
      %p341 = pneg %p107
      %p342 = pneg %p131
      %p343 = pneg %p128
      %p344 = pneg %p152
      %p345 = pneg %p149
      %p346 = pneg %p173
      %p347 = pneg %p170
      %p348 = pneg %p194
      %p349 = pneg %p191
      %p350 = pneg %p215
      %p351 = pneg %p212
      %p352 = pneg %p236
      %p353 = pneg %p233
      %p354 = pneg %p262
      %p355 = pneg %p259
      %p356 = scmp.lt.s32.totalorder %s21, 1
      %s357 = scalar_select %p356, %s21, 1
      %s358 = smul.addr %s357, 8
      %s359 = scalar_lea.vmem %s10, %s358
      %p360 = scmp.lt.s32.totalorder %s21, 1
      %s361 = scalar_select %p360, %s21, 1
      %s362 = scalar_lea.vmem %s0, %s361
      %p363 = scmp.lt.s32.totalorder %s21, 1
      %s364 = scalar_select %p363, %s21, 1
      %s365 = smul.addr %s364, 2
      %s366 = smul.addr %s365, 4
      %s367 = scalar_lea.vmem %s1, %s366
      %p368 = scmp.lt.s32.totalorder %s21, 1
      %s369 = scalar_select %p368, %s21, 1
      %s370 = smul.addr %s369, 8
      %s371 = scalar_lea.vmem %s10, %s370
      %v373 = vld [vmem:[%s362] sm:$0x1]
      %v374 = vld [vmem:[%s2] sm:$0xf]
      %v375 = vld [vmem:[%s2 + $0x4] sm:$0xf]
      %v376 = vld [vmem:[%s2 + $0x8] sm:$0xf]
      %v377 = vld [vmem:[%s2 + $0xc] sm:$0xf]
      %v378 = vld [vmem:[%s3] sm:$0x1]
      %v383 = vunpack.c.l.b16 %v374
      %v384 = vunpack.c.l.b16 %v375
      %v385 = vunpack.c.l.b16 %v376
      %v386 = vunpack.c.l.b16 %v377
      %v387 = vpack.c.b16 %v384, %v383
      %v388 = vpack.c.b16 %v386, %v385
      %vm391 = vcmask 261120
      %v393 = vsel %vm391, %v373, 0
      %395 = vmatpush.bf16.msra.mxu0 0
      %396 = vmatpush.bf16.msra.mxu0 0
      %397 = vmatpush.bf16.msra.mxu0 0
      %398 = vmatpush.bf16.msra.mxu0 0
      %399 = vmatpush.bf16.msra.mxu0 0
      %400 = vmatpush.bf16.msra.mxu0 0
      %401 = vmatpush.bf16.msra.mxu0 %v388
      %402 = vmatpush.bf16.msra.mxu0 %v387
      %403 = vmatmul.bf16.gmra.mxu0 %v393
      %v404 = vpop.f32.mrf.mxu0
      %v405 = vadd.f32 %v378, %v404
      %v406 = vpop.f32.mrf.mxu0
      %407 = vdwg.mxu0
      %v408 = vxor.u32 %v405, 2147483648
      %v409 = vmul.f32 %v408, 1.442695
      %v410 = vpow.pop %v409
      %v411 = vadd.f32 %v410, 1.0
      %v412 = vrcp.pop %v411
      %v413 = vmul.f32 %v411, %v412
      %v414 = vsub.f32 1.0, %v413
      %v415 = vmul.f32 %v412, %v414
      %v416 = vadd.f32 %v412, %v415
      %vm417 = vweird.f32 %v411
      %vm418 = vweird.f32 %v412
      %vm419 = vmor %vm417, %vm418
      %v420 = vsel %vm419, %v412, %v416
      %v421 = vand.u32 2147483647, %v411
      %vm422 = vcmp.eq.f32.partialorder %v421, 8.507059e+37
      %v423 = vand.u32 %v411, 2147483648
      %v424 = vor.u32 1.1754944e-38, %v423
      %v425 = vsel %vm422, %v424, %v420
      %v426 = vmul.f32 1.0, %v425
      %v427 = vmul.f32 %v405, %v426
      %v428 = vpack.c.bf16 %v427, %v427
      %v429 = vld [vmem:[%s4] sm:$0xf]
      %v430 = vld [vmem:[%s4 + $0x4] sm:$0xf]
      %v431 = vld [vmem:[%s4 + $0x8] sm:$0xf]
      %v432 = vld [vmem:[%s4 + $0xc] sm:$0xf]
      %v433 = vld [vmem:[%s5] sm:$0x1]
      %v438 = vunpack.c.l.b16 %v429
      %v439 = vunpack.c.l.b16 %v430
      %v440 = vunpack.c.l.b16 %v431
      %v441 = vunpack.c.l.b16 %v432
      %v442 = vpack.c.b16 %v439, %v438
      %v443 = vpack.c.b16 %v441, %v440
      %v447 = vsel %vm391, %v428, 0
      %449 = vmatpush.bf16.msra.mxu0 0
      %450 = vmatpush.bf16.msra.mxu0 0
      %451 = vmatpush.bf16.msra.mxu0 0
      %452 = vmatpush.bf16.msra.mxu0 0
      %453 = vmatpush.bf16.msra.mxu0 0
      %454 = vmatpush.bf16.msra.mxu0 0
      %455 = vmatpush.bf16.msra.mxu0 %v443
      %456 = vmatpush.bf16.msra.mxu0 %v442
      %457 = vmatmul.bf16.gmra.mxu0 %v447
      %v458 = vpop.f32.mrf.mxu0
      %v459 = vadd.f32 %v433, %v458
      %v460 = vpop.f32.mrf.mxu0
      %461 = vdwg.mxu0
      %463 = vrot.lane.b32.xlu0 %v459, 32
      %v464 = vpop.permute.xlu0 %463
      %466 = vrot.lane.b32.xlu0 %v459, 64
      %v467 = vpop.permute.xlu0 %466
      %469 = vrot.lane.b32.xlu0 %v459, 96
      %v470 = vpop.permute.xlu0 %469
      %v472 = vsel %vm391, %v459, %v464
      %vm473 = vcmask 523264
      %v474 = vsel %vm473, %v472, %v467
      %vm475 = vcmask 785408
      %v476 = vsel %vm475, %v474, %v470
      %v477 = vsel %vm391, %v470, %v459
      %v478 = vsel %vm473, %v477, %v464
      %v479 = vsel %vm475, %v478, %v467
      %v480 = vld [vmem:[%s367] sm:$0xf]
      %v481 = vld [vmem:[%s367 + $0x4] sm:$0x1]
      %v482 = vld [vmem:[%s6] sm:$0xff]
      %v483 = vld [vmem:[%s6 + $0x8] sm:$0xff]
      %v484 = vld [vmem:[%s6 + $0x10] sm:$0xff]
      %v485 = vld [vmem:[%s6 + $0x18] sm:$0xff]
      %s486 = scalar_lea.vmem %s6, 32
      %v487 = vld [vmem:[%s486] sm:$0xff]
      %v488 = vld [vmem:[%s486 + $0x8] sm:$0xff]
      %v489 = vld [vmem:[%s486 + $0x10] sm:$0xff]
      %v490 = vld [vmem:[%s486 + $0x18] sm:$0xff]
      %v493 = vunpack.c.l.b16 %v480
      %v494 = vunpack.c.l.b16 %v481
      %v495 = vpack.c.b16 %v494, %v493
      %v497 = vshrl.u32 %v495, 16
      %v499 = vshll.u32 %v495, 16
      %v501 = vrot.slane %v499, 1
      %v502 = vor.u32 %v497, %v501
      %v507 = vunpack.c.l.b16 %v487
      %v508 = vunpack.c.h.b16 %v487
      %v509 = vunpack.c.l.b16 %v488
      %v510 = vunpack.c.h.b16 %v488
      %v511 = vunpack.c.l.b16 %v489
      %v512 = vunpack.c.h.b16 %v489
      %v513 = vunpack.c.l.b16 %v490
      %v514 = vunpack.c.h.b16 %v490
      %v515 = vpack.c.b16 %v509, %v507
      %v516 = vpack.c.b16 %v510, %v508
      %v517 = vpack.c.b16 %v513, %v511
      %v518 = vpack.c.b16 %v514, %v512
      %v524 = vsel %vm391, %v502, 0
      %526 = vmatpush.bf16.msra.mxu0 0
      %527 = vmatpush.bf16.msra.mxu0 0
      %528 = vmatpush.bf16.msra.mxu0 0
      %529 = vmatpush.bf16.msra.mxu0 0
      %530 = vmatpush.bf16.msra.mxu0 0
      %531 = vmatpush.bf16.msra.mxu0 0
      %532 = vmatpush.bf16.msra.mxu0 %v517
      %533 = vmatpush.bf16.msra.mxu0 %v515
      %534 = vmatmul.bf16.gmra.mxu0 %v524
      %v535 = vpop.f32.mrf.mxu0
      %v536 = vadd.f32 0.0, %v535
      %v537 = vpop.f32.mrf.mxu0
      %538 = vdwg.mxu0
      %539 = vmatpush.bf16.msra.mxu0 0
      %540 = vmatpush.bf16.msra.mxu0 0
      %541 = vmatpush.bf16.msra.mxu0 0
      %542 = vmatpush.bf16.msra.mxu0 0
      %543 = vmatpush.bf16.msra.mxu0 0
      %544 = vmatpush.bf16.msra.mxu0 0
      %545 = vmatpush.bf16.msra.mxu0 %v518
      %546 = vmatpush.bf16.msra.mxu0 %v516
      %547 = vmatmul.bf16.gmra.mxu0 %v524
      %v548 = vpop.f32.mrf.mxu0
      %v549 = vadd.f32 0.0, %v548
      %v550 = vpop.f32.mrf.mxu0
      %551 = vdwg.mxu0
      %v556 = vunpack.c.l.b16 %v482
      %v557 = vunpack.c.h.b16 %v482
      %v558 = vunpack.c.l.b16 %v483
      %v559 = vunpack.c.h.b16 %v483
      %v560 = vunpack.c.l.b16 %v484
      %v561 = vunpack.c.h.b16 %v484
      %v562 = vunpack.c.l.b16 %v485
      %v563 = vunpack.c.h.b16 %v485
      %v564 = vpack.c.b16 %v558, %v556
      %v565 = vpack.c.b16 %v559, %v557
      %v566 = vpack.c.b16 %v562, %v560
      %v567 = vpack.c.b16 %v563, %v561
      %v573 = vsel %vm391, %v480, 0
      %575 = vmatpush.bf16.msra.mxu0 0
      %576 = vmatpush.bf16.msra.mxu0 0
      %577 = vmatpush.bf16.msra.mxu0 0
      %578 = vmatpush.bf16.msra.mxu0 0
      %579 = vmatpush.bf16.msra.mxu0 0
      %580 = vmatpush.bf16.msra.mxu0 0
      %581 = vmatpush.bf16.msra.mxu0 %v566
      %582 = vmatpush.bf16.msra.mxu0 %v564
      %583 = vmatmul.bf16.gmra.mxu0 %v573
      %v584 = vpop.f32.mrf.mxu0
      %v585 = vadd.f32 %v536, %v584
      %v586 = vpop.f32.mrf.mxu0
      %587 = vdwg.mxu0
      %588 = vmatpush.bf16.msra.mxu0 0
      %589 = vmatpush.bf16.msra.mxu0 0
      %590 = vmatpush.bf16.msra.mxu0 0
      %591 = vmatpush.bf16.msra.mxu0 0
      %592 = vmatpush.bf16.msra.mxu0 0
      %593 = vmatpush.bf16.msra.mxu0 0
      %594 = vmatpush.bf16.msra.mxu0 %v567
      %595 = vmatpush.bf16.msra.mxu0 %v565
      %596 = vmatmul.bf16.gmra.mxu0 %v573
      %v597 = vpop.f32.mrf.mxu0
      %v598 = vadd.f32 %v549, %v597
      %v599 = vpop.f32.mrf.mxu0
      %600 = vdwg.mxu0
      %s601 = scalar_lea.vmem %s6, 64
      %v602 = vld [vmem:[%s601] sm:$0xff]
      %v603 = vld [vmem:[%s601 + $0x8] sm:$0xff]
      %v604 = vld [vmem:[%s601 + $0x10] sm:$0xff]
      %v605 = vld [vmem:[%s601 + $0x18] sm:$0xff]
      %v606 = vrot.slane %v495, 1
      %v611 = vunpack.c.l.b16 %v602
      %v612 = vunpack.c.h.b16 %v602
      %v613 = vunpack.c.l.b16 %v603
      %v614 = vunpack.c.h.b16 %v603
      %v615 = vunpack.c.l.b16 %v604
      %v616 = vunpack.c.h.b16 %v604
      %v617 = vunpack.c.l.b16 %v605
      %v618 = vunpack.c.h.b16 %v605
      %v619 = vpack.c.b16 %v613, %v611
      %v620 = vpack.c.b16 %v614, %v612
      %v621 = vpack.c.b16 %v617, %v615
      %v622 = vpack.c.b16 %v618, %v616
      %v628 = vsel %vm391, %v606, 0
      %630 = vmatpush.bf16.msra.mxu0 0
      %631 = vmatpush.bf16.msra.mxu0 0
      %632 = vmatpush.bf16.msra.mxu0 0
      %633 = vmatpush.bf16.msra.mxu0 0
      %634 = vmatpush.bf16.msra.mxu0 0
      %635 = vmatpush.bf16.msra.mxu0 0
      %636 = vmatpush.bf16.msra.mxu0 %v621
      %637 = vmatpush.bf16.msra.mxu0 %v619
      %638 = vmatmul.bf16.gmra.mxu0 %v628
      %v639 = vpop.f32.mrf.mxu0
      %v640 = vadd.f32 0.0, %v639
      %v641 = vpop.f32.mrf.mxu0
      %642 = vdwg.mxu0
      %643 = vmatpush.bf16.msra.mxu0 0
      %644 = vmatpush.bf16.msra.mxu0 0
      %645 = vmatpush.bf16.msra.mxu0 0
      %646 = vmatpush.bf16.msra.mxu0 0
      %647 = vmatpush.bf16.msra.mxu0 0
      %648 = vmatpush.bf16.msra.mxu0 0
      %649 = vmatpush.bf16.msra.mxu0 %v622
      %650 = vmatpush.bf16.msra.mxu0 %v620
      %651 = vmatmul.bf16.gmra.mxu0 %v628
      %v652 = vpop.f32.mrf.mxu0
      %v653 = vadd.f32 0.0, %v652
      %v654 = vpop.f32.mrf.mxu0
      %655 = vdwg.mxu0
      %v656 = vadd.f32 %v585, %v640
      %v657 = vadd.f32 %v598, %v653
      %v658 = vld [vmem:[%s7] sm:$0x3]
      %v660 = vperm.slane %v658, 0
      %v661 = vperm.slane %v658, 1
      %v664 = vadd.f32 %v656, %v660
      %v665 = vadd.f32 %v657, %v661
      %v666 = vadd.f32 %v476, 1.0
      %v667 = vperm.slane %v666, 0
      %v668 = vmul.f32 %v664, %v667
      %v669 = vmul.f32 %v665, %v667
      %v670 = vperm.slane %v479, 0
      %v671 = vadd.f32 %v668, %v670
      %v672 = vadd.f32 %v669, %v670
      %v673 = vmul.f32 %v671, %v671
      %v674 = vmul.f32 %v672, %v672
      %v675 = vmul.f32 %v671, %v673
      %v676 = vmul.f32 %v672, %v674
      %v677 = vmul.f32 %v675, 0.044715
      %v678 = vmul.f32 %v676, 0.044715
      %v679 = vadd.f32 %v671, %v677
      %v680 = vadd.f32 %v672, %v678
      %v681 = vmul.f32 %v679, 0.7978846
      %v682 = vmul.f32 %v680, 0.7978846
      %v683 = vtanh.pop %v681
      %v684 = vtanh.pop %v682
      %v685 = vadd.f32 %v683, 1.0
      %v686 = vadd.f32 %v684, 1.0
      %v687 = vmul.f32 %v685, 0.5
      %v688 = vmul.f32 %v686, 0.5
      %v689 = vmul.f32 %v671, %v687
      %v690 = vmul.f32 %v672, %v688
      %v693 = vrot.slane %v689, 7
      %v694 = vrot.slane %v690, 7
      %vm697 = vcmask 1040384
      %v698 = vsel %vm697, 0.0, %v693
      %v699 = vsel %vm697, 0.0, %v694
      %v700 = vsel %vm697, %v693, 0.0
      %v701 = vsel %vm697, %v694, 0.0
      %v702 = vpack.c.bf16 %v699, %v698
      %v703 = vpack.c.bf16 %v701, %v700
      %v704 = vld [vmem:[%s8] sm:$0xf]
      %v705 = vld [vmem:[%s8 + $0x4] sm:$0xf]
      %v706 = vld [vmem:[%s8 + $0x8] sm:$0xf]
      %v707 = vld [vmem:[%s8 + $0xc] sm:$0xf]
      %v708 = vld [vmem:[%s8 + $0x10] sm:$0xf]
      %v709 = vld [vmem:[%s8 + $0x14] sm:$0xf]
      %v710 = vld [vmem:[%s8 + $0x18] sm:$0xf]
      %v711 = vld [vmem:[%s8 + $0x1c] sm:$0xf]
      %v712 = vld [vmem:[%s8 + $0x20] sm:$0xf]
      %v713 = vld [vmem:[%s8 + $0x24] sm:$0xf]
      %v714 = vld [vmem:[%s8 + $0x28] sm:$0xf]
      %v715 = vld [vmem:[%s8 + $0x2c] sm:$0xf]
      %v716 = vld [vmem:[%s8 + $0x30] sm:$0xf]
      %v717 = vld [vmem:[%s8 + $0x34] sm:$0xf]
      %v718 = vld [vmem:[%s8 + $0x38] sm:$0xf]
      %v719 = vld [vmem:[%s8 + $0x3c] sm:$0xf]
      %v720 = vld [vmem:[%s8 + $0x40] sm:$0xf]
      %v721 = vld [vmem:[%s8 + $0x44] sm:$0xf]
      %v722 = vld [vmem:[%s8 + $0x48] sm:$0xf]
      %v723 = vld [vmem:[%s8 + $0x4c] sm:$0xf]
      %v724 = vld [vmem:[%s8 + $0x50] sm:$0xf]
      %v725 = vld [vmem:[%s8 + $0x54] sm:$0xf]
      %v726 = vld [vmem:[%s8 + $0x58] sm:$0xf]
      %v727 = vld [vmem:[%s8 + $0x5c] sm:$0xf]
      %v728 = vld [vmem:[%s8 + $0x60] sm:$0xf]
      %v729 = vld [vmem:[%s8 + $0x64] sm:$0xf]
      %v730 = vld [vmem:[%s8 + $0x68] sm:$0xf]
      %v731 = vld [vmem:[%s8 + $0x6c] sm:$0xf]
      %v732 = vld [vmem:[%s8 + $0x70] sm:$0xf]
      %v733 = vld [vmem:[%s8 + $0x74] sm:$0xf]
      %v734 = vld [vmem:[%s8 + $0x78] sm:$0xf]
      %v735 = vld [vmem:[%s8 + $0x7c] sm:$0xf]
      %s736 = scalar_lea.vmem %s8, 128
      %v737 = vld [vmem:[%s736] sm:$0xf]
      %v738 = vld [vmem:[%s736 + $0x4] sm:$0xf]
      %v739 = vld [vmem:[%s736 + $0x8] sm:$0xf]
      %v740 = vld [vmem:[%s736 + $0xc] sm:$0xf]
      %v741 = vld [vmem:[%s736 + $0x10] sm:$0xf]
      %v742 = vld [vmem:[%s736 + $0x14] sm:$0xf]
      %v743 = vld [vmem:[%s736 + $0x18] sm:$0xf]
      %v744 = vld [vmem:[%s736 + $0x1c] sm:$0xf]
      %v745 = vld [vmem:[%s736 + $0x20] sm:$0xf]
      %v746 = vld [vmem:[%s736 + $0x24] sm:$0xf]
      %v747 = vld [vmem:[%s736 + $0x28] sm:$0xf]
      %v748 = vld [vmem:[%s736 + $0x2c] sm:$0xf]
      %v749 = vld [vmem:[%s736 + $0x30] sm:$0xf]
      %v750 = vld [vmem:[%s736 + $0x34] sm:$0xf]
      %v751 = vld [vmem:[%s736 + $0x38] sm:$0xf]
      %v752 = vld [vmem:[%s736 + $0x3c] sm:$0xf]
      %v753 = vld [vmem:[%s736 + $0x40] sm:$0xf]
      %v754 = vld [vmem:[%s736 + $0x44] sm:$0xf]
      %v755 = vld [vmem:[%s736 + $0x48] sm:$0xf]
      %v756 = vld [vmem:[%s736 + $0x4c] sm:$0xf]
      %v757 = vld [vmem:[%s736 + $0x50] sm:$0xf]
      %v758 = vld [vmem:[%s736 + $0x54] sm:$0xf]
      %v759 = vld [vmem:[%s736 + $0x58] sm:$0xf]
      %v760 = vld [vmem:[%s736 + $0x5c] sm:$0xf]
      %v761 = vld [vmem:[%s736 + $0x60] sm:$0xf]
      %v762 = vld [vmem:[%s736 + $0x64] sm:$0xf]
      %v763 = vld [vmem:[%s736 + $0x68] sm:$0xf]
      %v764 = vld [vmem:[%s736 + $0x6c] sm:$0xf]
      %v765 = vld [vmem:[%s736 + $0x70] sm:$0xf]
      %v766 = vld [vmem:[%s736 + $0x74] sm:$0xf]
      %v767 = vld [vmem:[%s736 + $0x78] sm:$0xf]
      %v768 = vld [vmem:[%s736 + $0x7c] sm:$0xf]
      %v771 = vunpack.c.l.b16 %v702
      %v772 = vunpack.c.h.b16 %v702
      %v773 = vunpack.c.l.b16 %v703
      %v774 = vunpack.c.h.b16 %v703
      %v775 = vpack.c.b16 %v773, %v771
      %v776 = vpack.c.b16 %v774, %v772
      %v778 = vshrl.u32 %v775, 16
      %v780 = vshll.u32 %v775, 16
      %v782 = vrot.slane %v780, 1
      %v783 = vor.u32 %v778, %v782
      %v785 = vshrl.u32 %v776, 16
      %v787 = vshll.u32 %v776, 16
      %v789 = vrot.slane %v787, 1
      %v790 = vor.u32 %v785, %v789
      %v825 = vunpack.c.l.b16 %v737
      %v826 = vunpack.c.l.b16 %v738
      %v827 = vunpack.c.l.b16 %v739
      %v828 = vunpack.c.l.b16 %v740
      %v829 = vunpack.c.l.b16 %v741
      %v830 = vunpack.c.l.b16 %v742
      %v831 = vunpack.c.l.b16 %v743
      %v832 = vunpack.c.l.b16 %v744
      %v833 = vunpack.c.l.b16 %v745
      %v834 = vunpack.c.l.b16 %v746
      %v835 = vunpack.c.l.b16 %v747
      %v836 = vunpack.c.l.b16 %v748
      %v837 = vunpack.c.l.b16 %v749
      %v838 = vunpack.c.l.b16 %v750
      %v839 = vunpack.c.l.b16 %v751
      %v840 = vunpack.c.l.b16 %v752
      %v841 = vunpack.c.l.b16 %v753
      %v842 = vunpack.c.l.b16 %v754
      %v843 = vunpack.c.l.b16 %v755
      %v844 = vunpack.c.l.b16 %v756
      %v845 = vunpack.c.l.b16 %v757
      %v846 = vunpack.c.l.b16 %v758
      %v847 = vunpack.c.l.b16 %v759
      %v848 = vunpack.c.l.b16 %v760
      %v849 = vunpack.c.l.b16 %v761
      %v850 = vunpack.c.l.b16 %v762
      %v851 = vunpack.c.l.b16 %v763
      %v852 = vunpack.c.l.b16 %v764
      %v853 = vunpack.c.l.b16 %v765
      %v854 = vunpack.c.l.b16 %v766
      %v855 = vunpack.c.l.b16 %v767
      %v856 = vunpack.c.l.b16 %v768
      %v857 = vpack.c.b16 %v826, %v825
      %v858 = vpack.c.b16 %v828, %v827
      %v859 = vpack.c.b16 %v830, %v829
      %v860 = vpack.c.b16 %v832, %v831
      %v861 = vpack.c.b16 %v834, %v833
      %v862 = vpack.c.b16 %v836, %v835
      %v863 = vpack.c.b16 %v838, %v837
      %v864 = vpack.c.b16 %v840, %v839
      %v865 = vpack.c.b16 %v842, %v841
      %v866 = vpack.c.b16 %v844, %v843
      %v867 = vpack.c.b16 %v846, %v845
      %v868 = vpack.c.b16 %v848, %v847
      %v869 = vpack.c.b16 %v850, %v849
      %v870 = vpack.c.b16 %v852, %v851
      %v871 = vpack.c.b16 %v854, %v853
      %v872 = vpack.c.b16 %v856, %v855
      %889 = vmatpush.bf16.msra.mxu0 %v864
      %890 = vmatpush.bf16.msra.mxu0 %v863
      %891 = vmatpush.bf16.msra.mxu0 %v862
      %892 = vmatpush.bf16.msra.mxu0 %v861
      %893 = vmatpush.bf16.msra.mxu0 %v860
      %894 = vmatpush.bf16.msra.mxu0 %v859
      %895 = vmatpush.bf16.msra.mxu0 %v858
      %896 = vmatpush.bf16.msra.mxu0 %v857
      %897 = vmatmul.bf16.gmra.mxu0 %v783
      %v898 = vpop.f32.mrf.mxu0
      %v899 = vadd.f32 0.0, %v898
      %v900 = vpop.f32.mrf.mxu0
      %901 = vdwg.mxu0
      %902 = vmatpush.bf16.msra.mxu0 %v872
      %903 = vmatpush.bf16.msra.mxu0 %v871
      %904 = vmatpush.bf16.msra.mxu0 %v870
      %905 = vmatpush.bf16.msra.mxu0 %v869
      %906 = vmatpush.bf16.msra.mxu0 %v868
      %907 = vmatpush.bf16.msra.mxu0 %v867
      %908 = vmatpush.bf16.msra.mxu0 %v866
      %909 = vmatpush.bf16.msra.mxu0 %v865
      %910 = vmatmul.bf16.gmra.mxu0 %v790
      %v911 = vpop.f32.mrf.mxu0
      %v912 = vadd.f32 %v899, %v911
      %v913 = vpop.f32.mrf.mxu0
      %914 = vdwg.mxu0
      %v915 = vpack.c.b16 %v771, %v771
      %v916 = vpack.c.b16 %v772, %v772
      %v951 = vunpack.c.l.b16 %v704
      %v952 = vunpack.c.l.b16 %v705
      %v953 = vunpack.c.l.b16 %v706
      %v954 = vunpack.c.l.b16 %v707
      %v955 = vunpack.c.l.b16 %v708
      %v956 = vunpack.c.l.b16 %v709
      %v957 = vunpack.c.l.b16 %v710
      %v958 = vunpack.c.l.b16 %v711
      %v959 = vunpack.c.l.b16 %v712
      %v960 = vunpack.c.l.b16 %v713
      %v961 = vunpack.c.l.b16 %v714
      %v962 = vunpack.c.l.b16 %v715
      %v963 = vunpack.c.l.b16 %v716
      %v964 = vunpack.c.l.b16 %v717
      %v965 = vunpack.c.l.b16 %v718
      %v966 = vunpack.c.l.b16 %v719
      %v967 = vunpack.c.l.b16 %v720
      %v968 = vunpack.c.l.b16 %v721
      %v969 = vunpack.c.l.b16 %v722
      %v970 = vunpack.c.l.b16 %v723
      %v971 = vunpack.c.l.b16 %v724
      %v972 = vunpack.c.l.b16 %v725
      %v973 = vunpack.c.l.b16 %v726
      %v974 = vunpack.c.l.b16 %v727
      %v975 = vunpack.c.l.b16 %v728
      %v976 = vunpack.c.l.b16 %v729
      %v977 = vunpack.c.l.b16 %v730
      %v978 = vunpack.c.l.b16 %v731
      %v979 = vunpack.c.l.b16 %v732
      %v980 = vunpack.c.l.b16 %v733
      %v981 = vunpack.c.l.b16 %v734
      %v982 = vunpack.c.l.b16 %v735
      %v983 = vpack.c.b16 %v952, %v951
      %v984 = vpack.c.b16 %v954, %v953
      %v985 = vpack.c.b16 %v956, %v955
      %v986 = vpack.c.b16 %v958, %v957
      %v987 = vpack.c.b16 %v960, %v959
      %v988 = vpack.c.b16 %v962, %v961
      %v989 = vpack.c.b16 %v964, %v963
      %v990 = vpack.c.b16 %v966, %v965
      %v991 = vpack.c.b16 %v968, %v967
      %v992 = vpack.c.b16 %v970, %v969
      %v993 = vpack.c.b16 %v972, %v971
      %v994 = vpack.c.b16 %v974, %v973
      %v995 = vpack.c.b16 %v976, %v975
      %v996 = vpack.c.b16 %v978, %v977
      %v997 = vpack.c.b16 %v980, %v979
      %v998 = vpack.c.b16 %v982, %v981
      %1015 = vmatpush.bf16.msra.mxu0 %v990
      %1016 = vmatpush.bf16.msra.mxu0 %v989
      %1017 = vmatpush.bf16.msra.mxu0 %v988
      %1018 = vmatpush.bf16.msra.mxu0 %v987
      %1019 = vmatpush.bf16.msra.mxu0 %v986
      %1020 = vmatpush.bf16.msra.mxu0 %v985
      %1021 = vmatpush.bf16.msra.mxu0 %v984
      %1022 = vmatpush.bf16.msra.mxu0 %v983
      %1023 = vmatmul.bf16.gmra.mxu0 %v915
      %v1024 = vpop.f32.mrf.mxu0
      %v1025 = vadd.f32 %v912, %v1024
      %v1026 = vpop.f32.mrf.mxu0
      %1027 = vdwg.mxu0
      %1028 = vmatpush.bf16.msra.mxu0 %v998
      %1029 = vmatpush.bf16.msra.mxu0 %v997
      %1030 = vmatpush.bf16.msra.mxu0 %v996
      %1031 = vmatpush.bf16.msra.mxu0 %v995
      %1032 = vmatpush.bf16.msra.mxu0 %v994
      %1033 = vmatpush.bf16.msra.mxu0 %v993
      %1034 = vmatpush.bf16.msra.mxu0 %v992
      %1035 = vmatpush.bf16.msra.mxu0 %v991
      %1036 = vmatmul.bf16.gmra.mxu0 %v916
      %v1037 = vpop.f32.mrf.mxu0
      %v1038 = vadd.f32 %v1025, %v1037
      %v1039 = vpop.f32.mrf.mxu0
      %1040 = vdwg.mxu0
      %s1041 = scalar_lea.vmem %s8, 256
      %v1042 = vld [vmem:[%s1041] sm:$0xf]
      %v1043 = vld [vmem:[%s1041 + $0x4] sm:$0xf]
      %v1044 = vld [vmem:[%s1041 + $0x8] sm:$0xf]
      %v1045 = vld [vmem:[%s1041 + $0xc] sm:$0xf]
      %v1046 = vld [vmem:[%s1041 + $0x10] sm:$0xf]
      %v1047 = vld [vmem:[%s1041 + $0x14] sm:$0xf]
      %v1048 = vld [vmem:[%s1041 + $0x18] sm:$0xf]
      %v1049 = vld [vmem:[%s1041 + $0x1c] sm:$0xf]
      %v1050 = vld [vmem:[%s1041 + $0x20] sm:$0xf]
      %v1051 = vld [vmem:[%s1041 + $0x24] sm:$0xf]
      %v1052 = vld [vmem:[%s1041 + $0x28] sm:$0xf]
      %v1053 = vld [vmem:[%s1041 + $0x2c] sm:$0xf]
      %v1054 = vld [vmem:[%s1041 + $0x30] sm:$0xf]
      %v1055 = vld [vmem:[%s1041 + $0x34] sm:$0xf]
      %v1056 = vld [vmem:[%s1041 + $0x38] sm:$0xf]
      %v1057 = vld [vmem:[%s1041 + $0x3c] sm:$0xf]
      %v1058 = vld [vmem:[%s1041 + $0x40] sm:$0xf]
      %v1059 = vld [vmem:[%s1041 + $0x44] sm:$0xf]
      %v1060 = vld [vmem:[%s1041 + $0x48] sm:$0xf]
      %v1061 = vld [vmem:[%s1041 + $0x4c] sm:$0xf]
      %v1062 = vld [vmem:[%s1041 + $0x50] sm:$0xf]
      %v1063 = vld [vmem:[%s1041 + $0x54] sm:$0xf]
      %v1064 = vld [vmem:[%s1041 + $0x58] sm:$0xf]
      %v1065 = vld [vmem:[%s1041 + $0x5c] sm:$0xf]
      %v1066 = vld [vmem:[%s1041 + $0x60] sm:$0xf]
      %v1067 = vld [vmem:[%s1041 + $0x64] sm:$0xf]
      %v1068 = vld [vmem:[%s1041 + $0x68] sm:$0xf]
      %v1069 = vld [vmem:[%s1041 + $0x6c] sm:$0xf]
      %v1070 = vld [vmem:[%s1041 + $0x70] sm:$0xf]
      %v1071 = vld [vmem:[%s1041 + $0x74] sm:$0xf]
      %v1072 = vld [vmem:[%s1041 + $0x78] sm:$0xf]
      %v1073 = vld [vmem:[%s1041 + $0x7c] sm:$0xf]
      %v1074 = vrot.slane %v775, 1
      %v1075 = vrot.slane %v776, 1
      %v1110 = vunpack.c.l.b16 %v1042
      %v1111 = vunpack.c.l.b16 %v1043
      %v1112 = vunpack.c.l.b16 %v1044
      %v1113 = vunpack.c.l.b16 %v1045
      %v1114 = vunpack.c.l.b16 %v1046
      %v1115 = vunpack.c.l.b16 %v1047
      %v1116 = vunpack.c.l.b16 %v1048
      %v1117 = vunpack.c.l.b16 %v1049
      %v1118 = vunpack.c.l.b16 %v1050
      %v1119 = vunpack.c.l.b16 %v1051
      %v1120 = vunpack.c.l.b16 %v1052
      %v1121 = vunpack.c.l.b16 %v1053
      %v1122 = vunpack.c.l.b16 %v1054
      %v1123 = vunpack.c.l.b16 %v1055
      %v1124 = vunpack.c.l.b16 %v1056
      %v1125 = vunpack.c.l.b16 %v1057
      %v1126 = vunpack.c.l.b16 %v1058
      %v1127 = vunpack.c.l.b16 %v1059
      %v1128 = vunpack.c.l.b16 %v1060
      %v1129 = vunpack.c.l.b16 %v1061
      %v1130 = vunpack.c.l.b16 %v1062
      %v1131 = vunpack.c.l.b16 %v1063
      %v1132 = vunpack.c.l.b16 %v1064
      %v1133 = vunpack.c.l.b16 %v1065
      %v1134 = vunpack.c.l.b16 %v1066
      %v1135 = vunpack.c.l.b16 %v1067
      %v1136 = vunpack.c.l.b16 %v1068
      %v1137 = vunpack.c.l.b16 %v1069
      %v1138 = vunpack.c.l.b16 %v1070
      %v1139 = vunpack.c.l.b16 %v1071
      %v1140 = vunpack.c.l.b16 %v1072
      %v1141 = vunpack.c.l.b16 %v1073
      %v1142 = vpack.c.b16 %v1111, %v1110
      %v1143 = vpack.c.b16 %v1113, %v1112
      %v1144 = vpack.c.b16 %v1115, %v1114
      %v1145 = vpack.c.b16 %v1117, %v1116
      %v1146 = vpack.c.b16 %v1119, %v1118
      %v1147 = vpack.c.b16 %v1121, %v1120
      %v1148 = vpack.c.b16 %v1123, %v1122
      %v1149 = vpack.c.b16 %v1125, %v1124
      %v1150 = vpack.c.b16 %v1127, %v1126
      %v1151 = vpack.c.b16 %v1129, %v1128
      %v1152 = vpack.c.b16 %v1131, %v1130
      %v1153 = vpack.c.b16 %v1133, %v1132
      %v1154 = vpack.c.b16 %v1135, %v1134
      %v1155 = vpack.c.b16 %v1137, %v1136
      %v1156 = vpack.c.b16 %v1139, %v1138
      %v1157 = vpack.c.b16 %v1141, %v1140
      %1174 = vmatpush.bf16.msra.mxu0 %v1149
      %1175 = vmatpush.bf16.msra.mxu0 %v1148
      %1176 = vmatpush.bf16.msra.mxu0 %v1147
      %1177 = vmatpush.bf16.msra.mxu0 %v1146
      %1178 = vmatpush.bf16.msra.mxu0 %v1145
      %1179 = vmatpush.bf16.msra.mxu0 %v1144
      %1180 = vmatpush.bf16.msra.mxu0 %v1143
      %1181 = vmatpush.bf16.msra.mxu0 %v1142
      %1182 = vmatmul.bf16.gmra.mxu0 %v1074
      %v1183 = vpop.f32.mrf.mxu0
      %v1184 = vadd.f32 0.0, %v1183
      %v1185 = vpop.f32.mrf.mxu0
      %1186 = vdwg.mxu0
      %1187 = vmatpush.bf16.msra.mxu0 %v1157
      %1188 = vmatpush.bf16.msra.mxu0 %v1156
      %1189 = vmatpush.bf16.msra.mxu0 %v1155
      %1190 = vmatpush.bf16.msra.mxu0 %v1154
      %1191 = vmatpush.bf16.msra.mxu0 %v1153
      %1192 = vmatpush.bf16.msra.mxu0 %v1152
      %1193 = vmatpush.bf16.msra.mxu0 %v1151
      %1194 = vmatpush.bf16.msra.mxu0 %v1150
      %1195 = vmatmul.bf16.gmra.mxu0 %v1075
      %v1196 = vpop.f32.mrf.mxu0
      %v1197 = vadd.f32 %v1184, %v1196
      %v1198 = vpop.f32.mrf.mxu0
      %1199 = vdwg.mxu0
      %v1200 = vadd.f32 %v1038, %v1197
      %v1201 = vld [vmem:[%s9] sm:$0x1]
      %v1203 = vperm.slane %v1201, 0
      %v1205 = vadd.f32 %v1200, %v1203
      %1206 = vst.msk [vmem:[%s371] sm:$0xff] %vm391, %v1205
      %p1207 = scmp.lt.s32.totalorder %s21, 1
      %s1208 = scalar_select %p1207, %s21, 1
      %s1209 = smul.addr %s1208, 8
      %s1210 = scalar_lea.vmem %s10, %s1209
      // Predicated region
      $region61: #{stable_diffusion_with_hybrid_encoder.3} parent=59 // pred_check
        %p1211 = pneg %p259
      $region62: #{stable_diffusion_with_hybrid_encoder.3} parent=59 // pred_check_branch
        %1213 = sbr.rel (%p1211) target = $region64
      $region63: #{stable_diffusion_with_hybrid_encoder.3} parent=59 // pred_region
        _
      $region64: #{stable_diffusion_with_hybrid_encoder.3} parent=59 // pred_fallthru
        _
    $region60: #{stable_diffusion_with_hybrid_encoder.3} parent=5 // pred_fallthru
      _
    %p1214 = scmp.le.s32.totalorder 2, %s16
    // Predicated region
    $region65: #{stable_diffusion_with_hybrid_encoder.3} parent=5 // pred_check
      %p1215 = pneg %p1214
    $region66: #{stable_diffusion_with_hybrid_encoder.3} parent=5 // pred_check_branch
      %1217 = sbr.rel (%p1215) target = $region68
    $region67: #{stable_diffusion_with_hybrid_encoder.3} parent=5 // pred_region
      %s1218 = ssub.s32 %s16, 2
      // Predicated region
      $region69: #{stable_diffusion_with_hybrid_encoder.3} parent=67 // pred_check
        %p1219 = pneg %p265
      $region70: #{stable_diffusion_with_hybrid_encoder.3} parent=67 // pred_check_branch
        %1221 = sbr.rel (%p1219) target = $region72
      $region71: #{stable_diffusion_with_hybrid_encoder.3} parent=67 // pred_region
        %p1222 = scmp.lt.s32.totalorder %s22, 1
        %s1223 = scalar_select %p1222, %s22, 1
        %s1224 = smul.addr %s1223, 8
        %s1225 = scalar_lea.vmem %s10, %s1224
      $region72: #{stable_diffusion_with_hybrid_encoder.3} parent=67 // pred_fallthru
        _
    $region68: #{stable_diffusion_with_hybrid_encoder.3} parent=5 // pred_fallthru
      _
  $region6: #{stable_diffusion_with_hybrid_encoder.3} parent=0 // loop_footer
    %s20 = sadd.s32 1, %s16
  $region7: #{stable_diffusion_with_hybrid_encoder.3} parent=0 // loop_footer_branch
    %15 = sbr.rel target = $region3
  $region8: #{stable_diffusion_with_hybrid_encoder.3} parent=0 // loop_exit
    _

</llo_original>
